<compile_context>
chip_gen: v6e
topology: v6e:2x2x1
jax: 0.10.0
libtpu: 0.0.40
codegen_flags: <defaults>
</compile_context>

<pallas_src>
import functools

import jax
import jax.numpy as jnp
from jax import lax
from jax.experimental import pallas as pl
from jax.experimental.pallas import tpu as pltpu


# ----------------------------------------------------------------------------- kernels


def attention_ln1_kernel(x_ref, w_in_ref, b_in_ref, w_out_ref, b_out_ref,
                         ln1_g_ref, ln1_b_ref, h1_ref, acc_ref, *, head_dim, head_tile):
    """Self-attention (head-streamed) + residual + LayerNorm1 for one batch row."""
    f32 = jnp.float32
    h = pl.program_id(1)
    nh = pl.num_programs(1)
    Hd = head_dim
    eps = 1e-5

    x = x_ref[...]                                     # (S, D) bf16
    scale = 1.0 / (Hd ** 0.5)

    @pl.when(h == 0)
    def _():
        acc_ref[...] = jnp.zeros_like(acc_ref)

    # One head (group) per grid step: QKV / output-projection weights are streamed per
    # head, so the full (D, 3D) weight is never resident and there are no head relayouts.
    for i in range(head_tile):                         # static unroll (head_tile small)
        qkv = jnp.dot(x, w_in_ref[i],
                      preferred_element_type=f32) + b_in_ref[i].astype(f32)  # (S, 3Hd)
        q = (qkv[:, 0:Hd] * scale).astype(x.dtype)     # fold 1/sqrt(Hd) into q once
        k = qkv[:, Hd:2 * Hd].astype(x.dtype)
        v = qkv[:, 2 * Hd:3 * Hd].astype(x.dtype)
        # q @ k^T without materializing a transpose (contract last dims of both).
        s = lax.dot_general(q, k, (((1,), (1,)), ((), ())),
                            preferred_element_type=f32)                      # (S, S)
        s = s - jnp.max(s, axis=-1, keepdims=True)
        p = jnp.exp(s)
        p = p * pl.reciprocal(jnp.sum(p, axis=-1, keepdims=True), approx=True)
        ctx = jnp.dot(p.astype(x.dtype), v, preferred_element_type=f32)      # (S, Hd)
        # Per-head output-projection contribution accumulated in f32 (no concat/relayout).
        acc_ref[...] += jnp.dot(ctx.astype(x.dtype), w_out_ref[i],
                                preferred_element_type=f32)                  # (S, D)

    @pl.when(h == nh - 1)
    def _():
        attn = acc_ref[...] + b_out_ref[...].astype(f32)
        h1 = x.astype(f32) + attn
        mu = jnp.mean(h1, axis=-1, keepdims=True)
        var = jnp.mean((h1 - mu) ** 2, axis=-1, keepdims=True)
        h1 = (h1 - mu) * lax.rsqrt(var + eps)
        h1 = h1 * ln1_g_ref[...].astype(f32) + ln1_b_ref[...].astype(f32)
        h1_ref[0] = h1.astype(h1_ref.dtype)            # bf16 (module runs half precision)


def ffn_ln2_kernel(h1_ref, w1_ref, b1_ref, w2_ref, b2_ref, ln2_g_ref, ln2_b_ref,
                   o_ref, acc_ref):
    """ReLU FFN (FF-dim streamed) + residual + LayerNorm2 for one (batch, S-tile) block."""
    f32 = jnp.float32
    f = pl.program_id(2)
    nf = pl.num_programs(2)
    eps = 1e-5

    @pl.when(f == 0)
    def _():
        acc_ref[...] = jnp.zeros_like(acc_ref)

    h1 = h1_ref[0]                                                      # (s_tile, D) bf16
    t = jnp.dot(h1, w1_ref[0], preferred_element_type=f32) + b1_ref[0].astype(f32)
    t = jnp.maximum(t, 0.0).astype(h1.dtype)                            # ReLU, back to bf16
    acc_ref[...] += jnp.dot(t, w2_ref[0], preferred_element_type=f32)   # (s_tile, D) f32

    @pl.when(f == nf - 1)
    def _():
        h2 = h1.astype(f32) + acc_ref[...] + b2_ref[...].astype(f32)
        mu = jnp.mean(h2, axis=-1, keepdims=True)
        var = jnp.mean((h2 - mu) ** 2, axis=-1, keepdims=True)
        h2 = (h2 - mu) * lax.rsqrt(var + eps)
        h2 = h2 * ln2_g_ref[...].astype(f32) + ln2_b_ref[...].astype(f32)
        o_ref[0] = h2.astype(o_ref.dtype)


# -------------------------------------------------------------------- tiling heuristics


def _default_vmem_limit_bytes():
    # Generation-aware budget: ~85% of physical VMEM (v5e/v6e 128 MiB -> ~109 MiB,
    # v7x 64 MiB -> ~54 MiB), leaving headroom for compiler-internal scratch.
    try:
        cap = pltpu.get_tpu_info().vmem_capacity_bytes
    except Exception:  # conservative fallback if the query is unavailable
        cap = 64 * 1024 * 1024
    return int(cap * 0.85)


def _pick_ff_tile(ff, vmem_limit_bytes):
    # Bigger FF tiles cut grid-step overhead and f32-accumulator RMW traffic; cap at
    # 2048 on 128 MiB chips (v5e/v6e) and 512 on small-VMEM chips (v7x).
    max_tile = 2048 if vmem_limit_bytes >= 96 * 1024 * 1024 else 512
    if ff <= max_tile:
        return ff
    t = (max_tile // 128) * 128
    while t >= 128:
        if ff % t == 0:
            return t
        t -= 128
    return ff


def _pick_s_tile(s, max_tile=512):
    if s <= max_tile:
        return s
    t = (max_tile // 8) * 8
    while t >= 8:
        if s % t == 0:
            return t
        t -= 8
    return s


# ------------------------------------------------------------------------ weight packing


def pack_params(params, *, nhead, ff_tile):
    """One-time repack of [in,out]-layout weights into kernel streaming layouts.
    TODO(synk): in production do this once on the host and cache the result."""
    D = params["w_out_t"].shape[0]
    Hd = D // nhead
    FF = params["w1_t"].shape[1]
    nf = FF // ff_tile

    def per_head(a):  # a: (rows, 3D) with [q | k | v] column blocks
        rows = a.shape[0]
        q = a[:, 0:D].reshape(rows, nhead, Hd)
        k = a[:, D:2 * D].reshape(rows, nhead, Hd)
        v = a[:, 2 * D:3 * D].reshape(rows, nhead, Hd)
        hkv = jnp.concatenate([q, k, v], axis=-1)          # (rows, H, 3Hd)
        return jnp.transpose(hkv, (1, 0, 2))               # (H, rows, 3Hd)

    return {
        "w_in_heads": per_head(params["w_in_t"]),          # (H, D, 3Hd)
        "b_in_heads": per_head(params["b_in"]),            # (H, 1, 3Hd)
        "w_out_heads": params["w_out_t"].reshape(nhead, Hd, D),
        "b_out": params["b_out"], "ln1_g": params["ln1_g"], "ln1_b": params["ln1_b"],
        # Tile-contiguous FFN weights: each streamed DMA is one contiguous slab.
        "w1_tiles": jnp.transpose(params["w1_t"].reshape(D, nf, ff_tile), (1, 0, 2)),
        "b1_tiles": params["b1"].reshape(nf, 1, ff_tile),
        "w2_tiles": params["w2_t"].reshape(nf, ff_tile, D),
        "b2": params["b2"], "ln2_g": params["ln2_g"], "ln2_b": params["ln2_b"],
    }


# ------------------------------------------------------------------------------- wrapper


def chatglm_embedding_forward(hidden_states, params, *, nhead, ff_tile=None, s_tile=None,
                              head_tile=1, stream_buffers=2, vmem_limit_bytes=None):
    """hidden_states: [S, B, D] (ChatGLM seq-first last-layer hidden states).
    Returns [B, S, D] (== reference transpose(0,1) + encoder layer)."""
    S, B, D = hidden_states.shape
    FF = params["w1_t"].shape[1]
    assert D % nhead == 0
    Hd = D // nhead
    assert D % 128 == 0, "hidden size should be lane-aligned (multiple of 128)"
    assert nhead % head_tile == 0

    if vmem_limit_bytes is None:
        vmem_limit_bytes = _default_vmem_limit_bytes()
    if ff_tile is None:
        ff_tile = _pick_ff_tile(FF, vmem_limit_bytes)
    assert FF % ff_tile == 0
    nf = FF // ff_tile
    if s_tile is None:
        s_tile = _pick_s_tile(S)
    assert S % s_tile == 0
    ns = S // s_tile
    nh = nhead // head_tile

    dtype = hidden_states.dtype
    packed = pack_params(params, nhead=nhead, ff_tile=ff_tile)

    # The reference does hidden_states.transpose(0, 1).  We skip the XLA transpose (a full
    # extra HBM read+write): a free contiguous reshape to [S, B*D] lets the BlockSpec DMA
    # pull the lane-aligned [S, D] slab of batch b inside the pipeline.
    x2 = hidden_states.reshape(S, B * D)

    inv = pl.Buffered(1)              # grid-invariant inputs: single-buffered
    stream = pl.Buffered(stream_buffers)  # streamed weight tiles (use 3 on v5e)

    # ---- pallas_call 1: attention (head-streamed) + residual + LayerNorm1 -------------
    kern1 = functools.partial(attention_ln1_kernel, head_dim=Hd, head_tile=head_tile)
    h1 = pl.pallas_call(
        kern1,
        out_shape=jax.ShapeDtypeStruct((B, S, D), dtype),
        grid_spec=pltpu.PrefetchScalarGridSpec(
            num_scalar_prefetch=0,
            grid=(B, nh),                                        # head axis (reduction) last
            in_specs=[
                pl.BlockSpec((S, D), lambda b, h: (0, b)),       # x: batch-b slab of [S,B*D]
                pl.BlockSpec((head_tile, D, 3 * Hd), lambda b, h: (h, 0, 0),
                             pipeline_mode=stream),              # per-head W_in
                pl.BlockSpec((head_tile, 1, 3 * Hd), lambda b, h: (h, 0, 0),
                             pipeline_mode=stream),              # per-head b_in
                pl.BlockSpec((head_tile, Hd, D), lambda b, h: (h, 0, 0),
                             pipeline_mode=stream),              # per-head W_out
                pl.BlockSpec((1, D), lambda b, h: (0, 0), pipeline_mode=inv),  # b_out
                pl.BlockSpec((1, D), lambda b, h: (0, 0), pipeline_mode=inv),  # ln1 gamma
                pl.BlockSpec((1, D), lambda b, h: (0, 0), pipeline_mode=inv),  # ln1 beta
            ],
            out_specs=pl.BlockSpec((1, S, D), lambda b, h: (b, 0, 0)),
            scratch_shapes=[pltpu.VMEM((S, D), jnp.float32)],    # attention f32 accumulator
        ),
        compiler_params=pltpu.CompilerParams(
            dimension_semantics=("parallel", "arbitrary"),
            vmem_limit_bytes=vmem_limit_bytes,
        ),
    )(x2, packed["w_in_heads"], packed["b_in_heads"], packed["w_out_heads"],
      packed["b_out"], packed["ln1_g"], packed["ln1_b"])

    # ---- pallas_call 2: FFN (S-tiled + FF-streamed) + residual + LayerNorm2 -----------
    out = pl.pallas_call(
        ffn_ln2_kernel,
        out_shape=jax.ShapeDtypeStruct((B, S, D), dtype),
        grid_spec=pltpu.PrefetchScalarGridSpec(
            num_scalar_prefetch=0,
            grid=(B, ns, nf),                                    # FF (reduction) axis last
            in_specs=[
                pl.BlockSpec((1, s_tile, D), lambda b, si, f: (b, si, 0)),   # h1 tile
                pl.BlockSpec((1, D, ff_tile), lambda b, si, f: (f, 0, 0),
                             pipeline_mode=stream),              # W1 tile (contiguous slab)
                pl.BlockSpec((1, 1, ff_tile), lambda b, si, f: (f, 0, 0),
                             pipeline_mode=stream),              # b1 tile
                pl.BlockSpec((1, ff_tile, D), lambda b, si, f: (f, 0, 0),
                             pipeline_mode=stream),              # W2 tile (contiguous slab)
                pl.BlockSpec((1, D), lambda b, si, f: (0, 0), pipeline_mode=inv),  # b2
                pl.BlockSpec((1, D), lambda b, si, f: (0, 0), pipeline_mode=inv),  # ln2 gamma
                pl.BlockSpec((1, D), lambda b, si, f: (0, 0), pipeline_mode=inv),  # ln2 beta
            ],
            out_specs=pl.BlockSpec((1, s_tile, D), lambda b, si, f: (b, si, 0)),
            scratch_shapes=[pltpu.VMEM((s_tile, D), jnp.float32)],  # FFN f32 accumulator
        ),
        compiler_params=pltpu.CompilerParams(
            dimension_semantics=("parallel", "parallel", "arbitrary"),
            vmem_limit_bytes=vmem_limit_bytes,
        ),
    )(h1, packed["w1_tiles"], packed["b1_tiles"], packed["w2_tiles"],
      packed["b2"], packed["ln2_g"], packed["ln2_b"])

    return out


# ----------------------------------------------------------------- params & f32 reference


def init_params(key, d_model, ff_dim, dtype=jnp.bfloat16):
    """Weights stored pre-transposed ([in, out] layout) so the kernel computes x @ W.
    When porting real torch weights, transpose each nn.Linear weight once on the host."""
    ks = jax.random.split(key, 10)
    s = 0.05
    return {
        "w_in_t": (s * jax.random.normal(ks[0], (d_model, 3 * d_model))).astype(dtype),
        "b_in": (0.02 * jax.random.normal(ks[1], (1, 3 * d_model))).astype(dtype),
        "w_out_t": (s * jax.random.normal(ks[2], (d_model, d_model))).astype(dtype),
        "b_out": (0.02 * jax.random.normal(ks[3], (1, d_model))).astype(dtype),
        "ln1_g": (1.0 + 0.1 * jax.random.normal(ks[4], (1, d_model))).astype(dtype),
        "ln1_b": (0.05 * jax.random.normal(ks[5], (1, d_model))).astype(dtype),
        "w1_t": (s * jax.random.normal(ks[6], (d_model, ff_dim))).astype(dtype),
        "b1": (0.02 * jax.random.normal(ks[7], (1, ff_dim))).astype(dtype),
        "w2_t": (s * jax.random.normal(ks[8], (ff_dim, d_model))).astype(dtype),
        "b2": (0.02 * jax.random.normal(ks[9], (1, d_model))).astype(dtype),
        "ln2_g": jnp.ones((1, d_model), dtype),
        "ln2_b": jnp.zeros((1, d_model), dtype),
    }


def reference_forward(hidden_states, params, *, nhead):
    """Pure-JAX f32 reference of the same forward (for correctness check)."""
    f32 = jnp.float32
    x = jnp.transpose(hidden_states, (1, 0, 2)).astype(f32)          # [B, S, D]
    B, S, D = x.shape
    Hd = D // nhead

    qkv = x @ params["w_in_t"].astype(f32) + params["b_in"].astype(f32)
    q, k, v = qkv[..., :D], qkv[..., D:2 * D], qkv[..., 2 * D:]
    q = q.reshape(B, S, nhead, Hd)
    k = k.reshape(B, S, nhead, Hd)
    v = v.reshape(B, S, nhead, Hd)
    scores = jnp.einsum("bqhd,bkhd->bhqk", q, k) / (Hd ** 0.5)
    p = jax.nn.softmax(scores, axis=-1)
    ctx = jnp.einsum("bhqk,bkhd->bqhd", p, v).reshape(B, S, D)
    attn = ctx @ params["w_out_t"].astype(f32) + params["b_out"].astype(f32)

    def ln(y, g, b):
        mu = jnp.mean(y, axis=-1, keepdims=True)
        var = jnp.mean((y - mu) ** 2, axis=-1, keepdims=True)
        return (y - mu) * lax.rsqrt(var + 1e-5) * g.astype(f32) + b.astype(f32)

    h1 = ln(x + attn, params["ln1_g"], params["ln1_b"])
    ff = jnp.maximum(h1 @ params["w1_t"].astype(f32) + params["b1"].astype(f32), 0.0)
    ff = ff @ params["w2_t"].astype(f32) + params["b2"].astype(f32)
    return ln(h1 + ff, params["ln2_g"], params["ln2_b"])


if __name__ == "__main__":
    # Small but TPU-shaped: seq=16, batch=2, hidden=256 (lane-aligned), 2 heads of 128,
    # ff=512.  bf16: the torch module calls .half(); bf16 is the TPU-native half float.
    S, B, D, H, FF = 16, 2, 256, 2, 512
    dtype = jnp.bfloat16

    key = jax.random.PRNGKey(0)
    k_x, k_p = jax.random.split(key)

    # Stand-in for llm(...).hidden_states[-1] : [seq, batch, hidden]
    hidden_states = jax.random.normal(k_x, (S, B, D), dtype=jnp.float32).astype(dtype)
    params = init_params(k_p, D, FF, dtype)

    # ff_tile=256 -> 2 FF tiles, head_tile=1 -> 2 head steps: exercises both streaming /
    # pl.when-accumulate paths.
    out = chatglm_embedding_forward(hidden_states, params, nhead=H,
                                    ff_tile=256, head_tile=1)
    out = jax.block_until_ready(out)
    assert out.shape == (B, S, D), out.shape

    ref = reference_forward(hidden_states, params, nhead=H)
    diff = out.astype(jnp.float32) - ref
    abs_err = float(jnp.max(jnp.abs(diff)))
    rel_err = float(jnp.linalg.norm(diff) / (jnp.linalg.norm(ref) + 1e-6))
    assert abs_err < 0.12, f"max abs err vs reference too large: {abs_err}"
    assert rel_err < 0.03, f"relative (L2) err vs reference too large: {rel_err}"
    print("KERNEL_OK")
</pallas_src>

<mosaic_0001>
module attributes {stable_mosaic.version = 11 : i64} {
  func.func @attention_ln1_kernel(%arg0: i32, %arg1: i32, %arg2: memref<16x256xbf16, #tpu.memory_space<vmem>>, %arg3: memref<1x256x384xbf16, #tpu.memory_space<vmem>>, %arg4: memref<1x1x384xbf16, #tpu.memory_space<vmem>>, %arg5: memref<1x128x256xbf16, #tpu.memory_space<vmem>>, %arg6: memref<1x256xbf16, #tpu.memory_space<vmem>>, %arg7: memref<1x256xbf16, #tpu.memory_space<vmem>>, %arg8: memref<1x256xbf16, #tpu.memory_space<vmem>>, %arg9: memref<1x16x256xbf16, #tpu.memory_space<vmem>>, %arg10: memref<16x256xf32, #tpu.memory_space<vmem>>) attributes {dimension_semantics = [#tpu.dimension_semantics<parallel>, #tpu.dimension_semantics<arbitrary>], iteration_bounds = array<i64: 2, 2>, scalar_prefetch = 0 : i64, scratch_operands = 1 : i64, tpu.core_type = #tpu.core_type<tc>, window_params = [{transform_indices = @transform_0, window_bounds = array<i64: 16, 256>}, {pipeline_mode = #tpu.pipeline_mode<double_buffered>, transform_indices = @transform_1, window_bounds = array<i64: 1, 256, 384>}, {pipeline_mode = #tpu.pipeline_mode<double_buffered>, transform_indices = @transform_2, window_bounds = array<i64: 1, 1, 384>}, {pipeline_mode = #tpu.pipeline_mode<double_buffered>, transform_indices = @transform_3, window_bounds = array<i64: 1, 128, 256>}, {pipeline_mode = #tpu.pipeline_mode<synchronous>, transform_indices = @transform_4, window_bounds = array<i64: 1, 256>}, {pipeline_mode = #tpu.pipeline_mode<synchronous>, transform_indices = @transform_5, window_bounds = array<i64: 1, 256>}, {pipeline_mode = #tpu.pipeline_mode<synchronous>, transform_indices = @transform_6, window_bounds = array<i64: 1, 256>}, {transform_indices = @transform_7, window_bounds = array<i64: 1, 16, 256>}]} {
    %c0 = arith.constant 0 : index
    %c0_0 = arith.constant 0 : index
    %0 = vector.load %arg2[%c0, %c0_0] : memref<16x256xbf16, #tpu.memory_space<vmem>>, vector<16x256xbf16>
    %c0_i32 = arith.constant 0 : i32
    %1 = arith.cmpi eq, %arg1, %c0_i32 : i32
    %2 = arith.extui %1 : i1 to i32
    %c0_i32_1 = arith.constant 0 : i32
    %3 = arith.cmpi ne, %2, %c0_i32_1 : i32
    scf.if %3 {
      %cst_22 = arith.constant 0.000000e+00 : f32
      %43 = vector.broadcast %cst_22 : f32 to vector<16x256xf32>
      %c0_23 = arith.constant 0 : index
      %c0_24 = arith.constant 0 : index
      %44 = vector.load %arg10[%c0_23, %c0_24] : memref<16x256xf32, #tpu.memory_space<vmem>>, vector<16x256xf32>
      tpu.vector_store %arg10[%c0_23, %c0_24], %43 {strides = array<i32>} : memref<16x256xf32, #tpu.memory_space<vmem>>, vector<16x256xf32>,
    } else {
    }
    %c0_2 = arith.constant 0 : index
    %c0_3 = arith.constant 0 : index
    %c0_4 = arith.constant 0 : index
    %4 = vector.load %arg3[%c0_2, %c0_3, %c0_4] : memref<1x256x384xbf16, #tpu.memory_space<vmem>>, vector<1x256x384xbf16>
    %5 = vector.shape_cast %4 : vector<1x256x384xbf16> to vector<256x384xbf16>
    %cst = arith.constant dense<0.000000e+00> : vector<16x384xf32>
    %6 = tpu.matmul %0, %5, %cst {dimension_numbers = #tpu.dot_dimension_numbers<[1], [0], [0], [1], [0, 0, 1, 1], [], []>} : vector<16x256xbf16>, vector<256x384xbf16>, vector<16x384xf32> -> vector<16x384xf32>
    %c0_5 = arith.constant 0 : index
    %c0_6 = arith.constant 0 : index
    %c0_7 = arith.constant 0 : index
    %7 = vector.load %arg4[%c0_5, %c0_6, %c0_7] : memref<1x1x384xbf16, #tpu.memory_space<vmem>>, vector<1x1x384xbf16>
    %8 = vector.shape_cast %7 : vector<1x1x384xbf16> to vector<1x384xbf16>
    %9 = arith.extf %8 : vector<1x384xbf16> to vector<1x384xf32>
    %10 = vector.broadcast %9 : vector<1x384xf32> to vector<16x384xf32>
    %11 = arith.addf %6, %10 : vector<16x384xf32>
    %12 = vector.extract_strided_slice %11 {offsets = [0, 0], sizes = [16, 128], strides = [1, 1]} : vector<16x384xf32> to vector<16x128xf32>
    %cst_8 = arith.constant 0.0883883461 : f32
    %13 = vector.broadcast %cst_8 : f32 to vector<16x128xf32>
    %14 = arith.mulf %12, %13 : vector<16x128xf32>
    %15 = arith.truncf %14 : vector<16x128xf32> to vector<16x128xbf16>
    %16 = vector.extract_strided_slice %11 {offsets = [0, 128], sizes = [16, 128], strides = [1, 1]} : vector<16x384xf32> to vector<16x128xf32>
    %17 = arith.truncf %16 : vector<16x128xf32> to vector<16x128xbf16>
    %18 = vector.extract_strided_slice %11 {offsets = [0, 256], sizes = [16, 128], strides = [1, 1]} : vector<16x384xf32> to vector<16x128xf32>
    %19 = arith.truncf %18 : vector<16x128xf32> to vector<16x128xbf16>
    %cst_9 = arith.constant dense<0.000000e+00> : vector<16x16xf32>
    %20 = tpu.matmul %15, %17, %cst_9 {dimension_numbers = #tpu.dot_dimension_numbers<[1], [1], [0], [0], [0, 0, 1, 0], [], []>} : vector<16x128xbf16>, vector<16x128xbf16>, vector<16x16xf32> -> vector<16x16xf32>
    %cst_10 = arith.constant dense<0xFF800000> : vector<16xf32>
    %21 = vector.multi_reduction <maximumf>, %20, %cst_10 [1] : vector<16x16xf32> to vector<16xf32>
    %22 = vector.shape_cast %21 : vector<16xf32> to vector<16x1xf32>
    %23 = vector.broadcast %22 : vector<16x1xf32> to vector<16x16xf32>
    %24 = arith.subf %20, %23 : vector<16x16xf32>
    %25 = math.exp %24 : vector<16x16xf32>
    %cst_11 = arith.constant dense<0.000000e+00> : vector<16xf32>
    %26 = vector.multi_reduction <add>, %25, %cst_11 [1] : vector<16x16xf32> to vector<16xf32>
    %27 = vector.shape_cast %26 : vector<16xf32> to vector<16x1xf32>
    %28 = tpu.reciprocal %27 {approx = true} : vector<16x1xf32> -> vector<16x1xf32>
    %29 = vector.broadcast %28 : vector<16x1xf32> to vector<16x16xf32>
    %30 = arith.mulf %25, %29 : vector<16x16xf32>
    %31 = arith.truncf %30 : vector<16x16xf32> to vector<16x16xbf16>
    %cst_12 = arith.constant dense<0.000000e+00> : vector<16x128xf32>
    %32 = tpu.matmul %31, %19, %cst_12 {dimension_numbers = #tpu.dot_dimension_numbers<[1], [0], [0], [1], [0, 0, 1, 1], [], []>} : vector<16x16xbf16>, vector<16x128xbf16>, vector<16x128xf32> -> vector<16x128xf32>
    %c0_13 = arith.constant 0 : index
    %c0_14 = arith.constant 0 : index
    %33 = vector.load %arg10[%c0_13, %c0_14] : memref<16x256xf32, #tpu.memory_space<vmem>>, vector<16x256xf32>
    %34 = arith.truncf %32 : vector<16x128xf32> to vector<16x128xbf16>
    %c0_15 = arith.constant 0 : index
    %c0_16 = arith.constant 0 : index
    %c0_17 = arith.constant 0 : index
    %35 = vector.load %arg5[%c0_15, %c0_16, %c0_17] : memref<1x128x256xbf16, #tpu.memory_space<vmem>>, vector<1x128x256xbf16>
    %36 = vector.shape_cast %35 : vector<1x128x256xbf16> to vector<128x256xbf16>
    %cst_18 = arith.constant dense<0.000000e+00> : vector<16x256xf32>
    %37 = tpu.matmul %34, %36, %cst_18 {dimension_numbers = #tpu.dot_dimension_numbers<[1], [0], [0], [1], [0, 0, 1, 1], [], []>} : vector<16x128xbf16>, vector<128x256xbf16>, vector<16x256xf32> -> vector<16x256xf32>
    %38 = arith.addf %33, %37 : vector<16x256xf32>
    %c0_19 = arith.constant 0 : index
    %c0_20 = arith.constant 0 : index
    %39 = vector.load %arg10[%c0_19, %c0_20] : memref<16x256xf32, #tpu.memory_space<vmem>>, vector<16x256xf32>
    tpu.vector_store %arg10[%c0_19, %c0_20], %38 {strides = array<i32>} : memref<16x256xf32, #tpu.memory_space<vmem>>, vector<16x256xf32>,
    %c1_i32 = arith.constant 1 : i32
    %40 = arith.cmpi eq, %arg1, %c1_i32 : i32
    %41 = arith.extui %40 : i1 to i32
    %c0_i32_21 = arith.constant 0 : i32
    %42 = arith.cmpi ne, %41, %c0_i32_21 : i32
    scf.if %42 {
      %c0_22 = arith.constant 0 : index
      %c0_23 = arith.constant 0 : index
      %43 = vector.load %arg10[%c0_22, %c0_23] : memref<16x256xf32, #tpu.memory_space<vmem>>, vector<16x256xf32>
      %c0_24 = arith.constant 0 : index
      %c0_25 = arith.constant 0 : index
      %44 = vector.load %arg6[%c0_24, %c0_25] : memref<1x256xbf16, #tpu.memory_space<vmem>>, vector<1x256xbf16>
      %45 = arith.extf %44 : vector<1x256xbf16> to vector<1x256xf32>
      %46 = vector.broadcast %45 : vector<1x256xf32> to vector<16x256xf32>
      %47 = arith.addf %43, %46 : vector<16x256xf32>
      %48 = arith.extf %0 : vector<16x256xbf16> to vector<16x256xf32>
      %49 = arith.addf %48, %47 : vector<16x256xf32>
      %cst_26 = arith.constant dense<0.000000e+00> : vector<16xf32>
      %50 = vector.multi_reduction <add>, %49, %cst_26 [1] : vector<16x256xf32> to vector<16xf32>
      %51 = vector.shape_cast %50 : vector<16xf32> to vector<16x1xf32>
      %cst_27 = arith.constant 2.560000e+02 : f32
      %52 = vector.broadcast %cst_27 : f32 to vector<16x1xf32>
      %53 = arith.divf %51, %52 : vector<16x1xf32>
      %54 = vector.broadcast %53 : vector<16x1xf32> to vector<16x256xf32>
      %55 = arith.subf %49, %54 : vector<16x256xf32>
      %56 = arith.mulf %55, %55 : vector<16x256xf32>
      %cst_28 = arith.constant dense<0.000000e+00> : vector<16xf32>
      %57 = vector.multi_reduction <add>, %56, %cst_28 [1] : vector<16x256xf32> to vector<16xf32>
      %58 = vector.shape_cast %57 : vector<16xf32> to vector<16x1xf32>
      %cst_29 = arith.constant 2.560000e+02 : f32
      %59 = vector.broadcast %cst_29 : f32 to vector<16x1xf32>
      %60 = arith.divf %58, %59 : vector<16x1xf32>
      %61 = vector.broadcast %53 : vector<16x1xf32> to vector<16x256xf32>
      %62 = arith.subf %49, %61 : vector<16x256xf32>
      %cst_30 = arith.constant 9.99999974E-6 : f32
      %63 = vector.broadcast %cst_30 : f32 to vector<16x1xf32>
      %64 = arith.addf %60, %63 : vector<16x1xf32>
      %65 = math.rsqrt %64 : vector<16x1xf32>
      %66 = vector.broadcast %65 : vector<16x1xf32> to vector<16x256xf32>
      %67 = arith.mulf %62, %66 : vector<16x256xf32>
      %c0_31 = arith.constant 0 : index
      %c0_32 = arith.constant 0 : index
      %68 = vector.load %arg7[%c0_31, %c0_32] : memref<1x256xbf16, #tpu.memory_space<vmem>>, vector<1x256xbf16>
      %69 = arith.extf %68 : vector<1x256xbf16> to vector<1x256xf32>
      %70 = vector.broadcast %69 : vector<1x256xf32> to vector<16x256xf32>
      %71 = arith.mulf %67, %70 : vector<16x256xf32>
      %c0_33 = arith.constant 0 : index
      %c0_34 = arith.constant 0 : index
      %72 = vector.load %arg8[%c0_33, %c0_34] : memref<1x256xbf16, #tpu.memory_space<vmem>>, vector<1x256xbf16>
      %73 = arith.extf %72 : vector<1x256xbf16> to vector<1x256xf32>
      %74 = vector.broadcast %73 : vector<1x256xf32> to vector<16x256xf32>
      %75 = arith.addf %71, %74 : vector<16x256xf32>
      %76 = arith.truncf %75 : vector<16x256xf32> to vector<16x256xbf16>
      %c0_35 = arith.constant 0 : index
      %c0_36 = arith.constant 0 : index
      %c0_37 = arith.constant 0 : index
      %77 = vector.load %arg9[%c0_35, %c0_36, %c0_37] : memref<1x16x256xbf16, #tpu.memory_space<vmem>>, vector<1x16x256xbf16>
      %78 = vector.shape_cast %77 : vector<1x16x256xbf16> to vector<16x256xbf16>
      %79 = vector.shape_cast %76 : vector<16x256xbf16> to vector<1x16x256xbf16>
      tpu.vector_store %arg9[%c0_35, %c0_36, %c0_37], %79 {strides = array<i32>} : memref<1x16x256xbf16, #tpu.memory_space<vmem>>, vector<1x16x256xbf16>,
    } else {
    }
    return
  }
  func.func @transform_0(%arg0: i32, %arg1: i32) -> (i32, i32) {
    %c0_i32 = arith.constant 0 : i32
    %c0_i32_0 = arith.constant 0 : i32
    return %c0_i32, %arg0 : i32, i32
  }
  func.func @transform_1(%arg0: i32, %arg1: i32) -> (i32, i32, i32) {
    %c0_i32 = arith.constant 0 : i32
    %c0_i32_0 = arith.constant 0 : i32
    %c0_i32_1 = arith.constant 0 : i32
    return %arg1, %c0_i32, %c0_i32_0 : i32, i32, i32
  }
  func.func @transform_2(%arg0: i32, %arg1: i32) -> (i32, i32, i32) {
    %c0_i32 = arith.constant 0 : i32
    %c0_i32_0 = arith.constant 0 : i32
    %c0_i32_1 = arith.constant 0 : i32
    return %arg1, %c0_i32, %c0_i32_0 : i32, i32, i32
  }
  func.func @transform_3(%arg0: i32, %arg1: i32) -> (i32, i32, i32) {
    %c0_i32 = arith.constant 0 : i32
    %c0_i32_0 = arith.constant 0 : i32
    %c0_i32_1 = arith.constant 0 : i32
    return %arg1, %c0_i32, %c0_i32_0 : i32, i32, i32
  }
  func.func @transform_4(%arg0: i32, %arg1: i32) -> (i32, i32) {
    %c0_i32 = arith.constant 0 : i32
    %c0_i32_0 = arith.constant 0 : i32
    %c0_i32_1 = arith.constant 0 : i32
    return %c0_i32, %c0_i32_0 : i32, i32
  }
  func.func @transform_5(%arg0: i32, %arg1: i32) -> (i32, i32) {
    %c0_i32 = arith.constant 0 : i32
    %c0_i32_0 = arith.constant 0 : i32
    %c0_i32_1 = arith.constant 0 : i32
    return %c0_i32, %c0_i32_0 : i32, i32
  }
  func.func @transform_6(%arg0: i32, %arg1: i32) -> (i32, i32) {
    %c0_i32 = arith.constant 0 : i32
    %c0_i32_0 = arith.constant 0 : i32
    %c0_i32_1 = arith.constant 0 : i32
    return %c0_i32, %c0_i32_0 : i32, i32
  }
  func.func @transform_7(%arg0: i32, %arg1: i32) -> (i32, i32, i32) {
    %c0_i32 = arith.constant 0 : i32
    %c0_i32_0 = arith.constant 0 : i32
    %c0_i32_1 = arith.constant 0 : i32
    return %arg0, %c0_i32, %c0_i32_0 : i32, i32, i32
  }
}

</mosaic_0001>

<llo_original>
// kernel: tpu_custom_call.1
$region0: #{tpu_custom_call.1}
  #allocation0 [shape = 'u32[]', space=smem, size = 0x4, offset = 0x4, fixed_abs, tag = 'smem constant byte address 0x4 - core index']
  #allocation1 [shape = 'u32[144,128]{1,0:T(1,128)}', space=vmem, size = 0x12000, scoped, tag = 'internal scratch']
  #allocation2 [shape = 'f32[16,256]{1,0:T(8,128)}', space=vmem, size = 0x4000, scoped, tag = 'scratch operand']
  %s0 = inlined_call_operand.hbm [shape: bf16[16,512], index: 0, kind: input, shape index: {}]
  %s1 = inlined_call_operand.hbm [shape: bf16[2,256,384], index: 1, kind: input, shape index: {}]
  %s2 = inlined_call_operand.vmem [shape: bf16[2,1,384], index: 2, kind: input, shape index: {}]
  %s3 = inlined_call_operand.hbm [shape: bf16[2,128,256], index: 3, kind: input, shape index: {}]
  %s4 = inlined_call_operand.vmem [shape: bf16[1,256], index: 4, kind: input, shape index: {}]
  %s5 = inlined_call_operand.vmem [shape: bf16[1,256], index: 5, kind: input, shape index: {}]
  %s6 = inlined_call_operand.vmem [shape: bf16[1,256], index: 6, kind: input, shape index: {}]
  %s7 = inlined_call_operand.hbm [shape: bf16[2,16,256], index: 7, kind: output, shape index: {}]
  %s8 = sld [smem:[#allocation0]]
  $region81: #{tpu_custom_call.1} parent=0
    _
  %s10 = ssub.s32 1, %s8
  %s11 = scalar_select 0, %s10, %s8
  $region1: #{tpu_custom_call.1} parent=0
    #allocation3 [shape = 'u8[16384]{0}', space=vmem, size = 0x4000, scoped, tag = 'input window, operand 0']
    #allocation4 [shape = 's32[2]{0}', space=sflag, size = 0x8, scoped, tag = 'scoped memory for tpu_custom_call.1']
    #allocation5 [shape = 's32[2]{0}', space=sflag, size = 0x8, scoped, tag = 'scoped memory for tpu_custom_call.1']
    #allocation6 [shape = 'u8[393216]{0}', space=vmem, size = 0x60000, scoped, tag = 'input window, operand 1']
    #allocation7 [shape = 's32[2]{0}', space=sflag, size = 0x8, scoped, tag = 'scoped memory for tpu_custom_call.1']
    #allocation8 [shape = 'u8[131072]{0}', space=vmem, size = 0x20000, scoped, tag = 'input window, operand 3']
    #allocation9 [shape = 'u8[16384]{0}', space=vmem, size = 0x4000, scoped, tag = 'output window, operand 0']
    %12 = vsyncpa [#allocation4], 0
    %s13 = scalar_lea.sflag [#allocation4], 1
    %14 = vsyncpa %s13, 0
    %15 = vsyncpa [#allocation7], 0
    %s16 = scalar_lea.sflag [#allocation7], 1
    %17 = vsyncpa %s16, 0
    %18 = vsyncpa [#allocation5], 0
    %s19 = scalar_lea.sflag [#allocation5], 1
    %20 = vsyncpa %s19, 0
    loop: start=0, step=1, limit=6
    $region2: #{tpu_custom_call.1} parent=1 // loop_pre_header
      _
    $region3: #{tpu_custom_call.1} parent=1 // loop_header
      %s22 = sphi 0, %s26
      %p23 = scmp.ge.s32.totalorder %s22, 6
      %s29 = sphi 0, %s41
      %s30 = sphi 0, %s37
      %s31 = sphi 0, %s29
      %s32 = sphi 0, %s30
      %s33 = sphi 0, %s31
      %s34 = sphi 0, %s32
      %s44 = sphi 0, %s46
      %s47 = sphi 0, %s44
      %s48 = sphi 0, %s47
      %s64 = sphi 0, %s48
      %s70 = sphi 0, %s72
      %s73 = sphi 0, %s70
      %s74 = sphi 0, %s73
      %s90 = sphi 0, %s74
      %s96 = sphi 0, %s98
      %s99 = sphi 0, %s96
      %s100 = sphi 0, %s99
      %s116 = sphi 0, %s100
      %s122 = sphi 0, %s124
      %s125 = sphi 0, %s122
      %s126 = sphi 0, %s125
      %s142 = sphi 0, %s126
      %s146 = sphi 0, %s146
      %s148 = sphi 0, %s146
      %s149 = sphi 0, %s148
      %s163 = sphi 0, %s149
      %s167 = sphi 0, %s167
      %s169 = sphi 0, %s167
      %s170 = sphi 0, %s169
      %s184 = sphi 0, %s170
      %s188 = sphi 0, %s188
      %s190 = sphi 0, %s188
      %s191 = sphi 0, %s190
      %s205 = sphi 0, %s191
      %s211 = sphi 0, %s213
      %s214 = sphi 0, %s211
      %s215 = sphi 0, %s214
      %s231 = sphi 0, %s215
    $region4: #{tpu_custom_call.1} parent=1 // loop_header_branch
      %25 = sbr.rel (%p23) target = $region8
    $region5: #{tpu_custom_call.1} parent=1 // loop_body
      %s27 = ssub.s32 %s22, 1
      %s28 = ssub.s32 %s22, 2
      %s35 = sadd.s32 1, %s30
      %p36 = scmp.ge.s32.totalorder %s35, 2
      %s37 = scalar_select %p36, 0, %s35
      %s38 = sadd.s32 1, %s29
      %s39 = scalar_select %p36, %s38, %s29
      %p40 = scmp.ge.s32.totalorder %s39, 2
      %s41 = scalar_select %p40, 0, %s39
      %s42 = ssub.s32 %s29, %s41
      %p43 = scmp.eq.s32.totalorder %s42, 0
      %s45 = sadd.s32 %s44, 1
      %s46 = scalar_select %p43, %s44, %s45
      %p49 = pneg %p43
      %p50 = scmp.eq.s32.totalorder %s22, 3
      %p51 = por %p49, %p50
      %p52 = scmp.ne.s32.totalorder %s44, %s47
      %p53 = scmp.eq.s32.totalorder %s22, 0
      %p54 = por %p52, %p53
      %p55 = scmp.ne.s32.totalorder %s44, %s47
      %p56 = scmp.eq.s32.totalorder %s27, 3
      %p57 = por %p55, %p56
      %p58 = scmp.ne.s32.totalorder %s47, %s48
      %p59 = scmp.eq.s32.totalorder %s27, 0
      %p60 = por %p58, %p59
      %p61 = scmp.ne.s32.totalorder %s47, %s48
      %p62 = scmp.eq.s32.totalorder %s28, 3
      %p63 = por %p61, %p62
      %p65 = scmp.ne.s32.totalorder %s48, %s64
      %p66 = scmp.eq.s32.totalorder %s28, 0
      %p67 = por %p65, %p66
      %s68 = ssub.s32 %s30, %s37
      %p69 = scmp.eq.s32.totalorder %s68, 0
      %s71 = sadd.s32 %s70, 1
      %s72 = scalar_select %p69, %s70, %s71
      %p75 = pneg %p69
      %p76 = scmp.eq.s32.totalorder %s22, 3
      %p77 = por %p75, %p76
      %p78 = scmp.ne.s32.totalorder %s70, %s73
      %p79 = scmp.eq.s32.totalorder %s22, 0
      %p80 = por %p78, %p79
      %p81 = scmp.ne.s32.totalorder %s70, %s73
      %p82 = scmp.eq.s32.totalorder %s27, 3
      %p83 = por %p81, %p82
      %p84 = scmp.ne.s32.totalorder %s73, %s74
      %p85 = scmp.eq.s32.totalorder %s27, 0
      %p86 = por %p84, %p85
      %p87 = scmp.ne.s32.totalorder %s73, %s74
      %p88 = scmp.eq.s32.totalorder %s28, 3
      %p89 = por %p87, %p88
      %p91 = scmp.ne.s32.totalorder %s74, %s90
      %p92 = scmp.eq.s32.totalorder %s28, 0
      %p93 = por %p91, %p92
      %s94 = ssub.s32 %s30, %s37
      %p95 = scmp.eq.s32.totalorder %s94, 0
      %s97 = sadd.s32 %s96, 1
      %s98 = scalar_select %p95, %s96, %s97
      %p101 = pneg %p95
      %p102 = scmp.eq.s32.totalorder %s22, 3
      %p103 = por %p101, %p102
      %p104 = scmp.ne.s32.totalorder %s96, %s99
      %p105 = scmp.eq.s32.totalorder %s22, 0
      %p106 = por %p104, %p105
      %p107 = scmp.ne.s32.totalorder %s96, %s99
      %p108 = scmp.eq.s32.totalorder %s27, 3
      %p109 = por %p107, %p108
      %p110 = scmp.ne.s32.totalorder %s99, %s100
      %p111 = scmp.eq.s32.totalorder %s27, 0
      %p112 = por %p110, %p111
      %p113 = scmp.ne.s32.totalorder %s99, %s100
      %p114 = scmp.eq.s32.totalorder %s28, 3
      %p115 = por %p113, %p114
      %p117 = scmp.ne.s32.totalorder %s100, %s116
      %p118 = scmp.eq.s32.totalorder %s28, 0
      %p119 = por %p117, %p118
      %s120 = ssub.s32 %s30, %s37
      %p121 = scmp.eq.s32.totalorder %s120, 0
      %s123 = sadd.s32 %s122, 1
      %s124 = scalar_select %p121, %s122, %s123
      %p127 = pneg %p121
      %p128 = scmp.eq.s32.totalorder %s22, 3
      %p129 = por %p127, %p128
      %p130 = scmp.ne.s32.totalorder %s122, %s125
      %p131 = scmp.eq.s32.totalorder %s22, 0
      %p132 = por %p130, %p131
      %p133 = scmp.ne.s32.totalorder %s122, %s125
      %p134 = scmp.eq.s32.totalorder %s27, 3
      %p135 = por %p133, %p134
      %p136 = scmp.ne.s32.totalorder %s125, %s126
      %p137 = scmp.eq.s32.totalorder %s27, 0
      %p138 = por %p136, %p137
      %p139 = scmp.ne.s32.totalorder %s125, %s126
      %p140 = scmp.eq.s32.totalorder %s28, 3
      %p141 = por %p139, %p140
      %p143 = scmp.ne.s32.totalorder %s126, %s142
      %p144 = scmp.eq.s32.totalorder %s28, 0
      %p145 = por %p143, %p144
      %s147 = sadd.s32 %s146, 1
      %p150 = scmp.eq.s32.totalorder %s22, 3
      %p151 = scmp.ne.s32.totalorder %s146, %s148
      %p152 = scmp.eq.s32.totalorder %s22, 0
      %p153 = por %p151, %p152
      %p154 = scmp.ne.s32.totalorder %s146, %s148
      %p155 = scmp.eq.s32.totalorder %s27, 3
      %p156 = por %p154, %p155
      %p157 = scmp.ne.s32.totalorder %s148, %s149
      %p158 = scmp.eq.s32.totalorder %s27, 0
      %p159 = por %p157, %p158
      %p160 = scmp.ne.s32.totalorder %s148, %s149
      %p161 = scmp.eq.s32.totalorder %s28, 3
      %p162 = por %p160, %p161
      %p164 = scmp.ne.s32.totalorder %s149, %s163
      %p165 = scmp.eq.s32.totalorder %s28, 0
      %p166 = por %p164, %p165
      %s168 = sadd.s32 %s167, 1
      %p171 = scmp.eq.s32.totalorder %s22, 3
      %p172 = scmp.ne.s32.totalorder %s167, %s169
      %p173 = scmp.eq.s32.totalorder %s22, 0
      %p174 = por %p172, %p173
      %p175 = scmp.ne.s32.totalorder %s167, %s169
      %p176 = scmp.eq.s32.totalorder %s27, 3
      %p177 = por %p175, %p176
      %p178 = scmp.ne.s32.totalorder %s169, %s170
      %p179 = scmp.eq.s32.totalorder %s27, 0
      %p180 = por %p178, %p179
      %p181 = scmp.ne.s32.totalorder %s169, %s170
      %p182 = scmp.eq.s32.totalorder %s28, 3
      %p183 = por %p181, %p182
      %p185 = scmp.ne.s32.totalorder %s170, %s184
      %p186 = scmp.eq.s32.totalorder %s28, 0
      %p187 = por %p185, %p186
      %s189 = sadd.s32 %s188, 1
      %p192 = scmp.eq.s32.totalorder %s22, 3
      %p193 = scmp.ne.s32.totalorder %s188, %s190
      %p194 = scmp.eq.s32.totalorder %s22, 0
      %p195 = por %p193, %p194
      %p196 = scmp.ne.s32.totalorder %s188, %s190
      %p197 = scmp.eq.s32.totalorder %s27, 3
      %p198 = por %p196, %p197
      %p199 = scmp.ne.s32.totalorder %s190, %s191
      %p200 = scmp.eq.s32.totalorder %s27, 0
      %p201 = por %p199, %p200
      %p202 = scmp.ne.s32.totalorder %s190, %s191
      %p203 = scmp.eq.s32.totalorder %s28, 3
      %p204 = por %p202, %p203
      %p206 = scmp.ne.s32.totalorder %s191, %s205
      %p207 = scmp.eq.s32.totalorder %s28, 0
      %p208 = por %p206, %p207
      %s209 = ssub.s32 %s29, %s41
      %p210 = scmp.eq.s32.totalorder %s209, 0
      %s212 = sadd.s32 %s211, 1
      %s213 = scalar_select %p210, %s211, %s212
      %p216 = pneg %p210
      %p217 = scmp.eq.s32.totalorder %s22, 3
      %p218 = por %p216, %p217
      %p219 = scmp.ne.s32.totalorder %s211, %s214
      %p220 = scmp.eq.s32.totalorder %s22, 0
      %p221 = por %p219, %p220
      %p222 = scmp.ne.s32.totalorder %s211, %s214
      %p223 = scmp.eq.s32.totalorder %s27, 3
      %p224 = por %p222, %p223
      %p225 = scmp.ne.s32.totalorder %s214, %s215
      %p226 = scmp.eq.s32.totalorder %s27, 0
      %p227 = por %p225, %p226
      %p228 = scmp.ne.s32.totalorder %s214, %s215
      %p229 = scmp.eq.s32.totalorder %s28, 3
      %p230 = por %p228, %p229
      %p232 = scmp.ne.s32.totalorder %s215, %s231
      %p233 = scmp.eq.s32.totalorder %s28, 0
      %p234 = por %p232, %p233
      %p235 = scmp.le.s32.totalorder 1, %s22
      %p236 = scmp.lt.s32.totalorder %s22, 5
      %p237 = pnand %p235, %p236
      %p238 = pneg %p237
      // Predicated region
      $region9: #{tpu_custom_call.1} parent=5 // pred_check
        _
      $region10: #{tpu_custom_call.1} parent=5 // pred_check_branch
        %240 = sbr.rel (%p237) target = $region12
      $region11: #{tpu_custom_call.1} parent=5 // pred_region
        %s241 = ssub.s32 %s22, 1
        // Predicated region
        $region13: #{tpu_custom_call.1} parent=11 // pred_check
          %p242 = pneg %p159
        $region14: #{tpu_custom_call.1} parent=11 // pred_check_branch
          %244 = sbr.rel (%p242) target = $region16
        $region15: #{tpu_custom_call.1} parent=11 // pred_region
          _
        $region16: #{tpu_custom_call.1} parent=11 // pred_fallthru
          _
        // Predicated region
        $region17: #{tpu_custom_call.1} parent=11 // pred_check
          %p245 = pneg %p180
        $region18: #{tpu_custom_call.1} parent=11 // pred_check_branch
          %247 = sbr.rel (%p245) target = $region20
        $region19: #{tpu_custom_call.1} parent=11 // pred_region
          _
        $region20: #{tpu_custom_call.1} parent=11 // pred_fallthru
          _
        // Predicated region
        $region21: #{tpu_custom_call.1} parent=11 // pred_check
          %p248 = pneg %p201
        $region22: #{tpu_custom_call.1} parent=11 // pred_check_branch
          %250 = sbr.rel (%p248) target = $region24
        $region23: #{tpu_custom_call.1} parent=11 // pred_region
          _
        $region24: #{tpu_custom_call.1} parent=11 // pred_fallthru
          _
      $region12: #{tpu_custom_call.1} parent=5 // pred_fallthru
        _
      %p251 = scmp.lt.s32.totalorder %s22, 4
      // Predicated region
      $region25: #{tpu_custom_call.1} parent=5 // pred_check
        %p252 = pneg %p251
      $region26: #{tpu_custom_call.1} parent=5 // pred_check_branch
        %254 = sbr.rel (%p252) target = $region28
      $region27: #{tpu_custom_call.1} parent=5 // pred_region
        // Predicated region
        $region29: #{tpu_custom_call.1} parent=27 // pred_check
          %p255 = pneg %p54
        $region30: #{tpu_custom_call.1} parent=27 // pred_check_branch
          %257 = sbr.rel (%p255) target = $region32
        $region31: #{tpu_custom_call.1} parent=27 // pred_region
          %s258 = sand.u32 %s44, 1
          %s259 = scalar_lea.sflag [#allocation4], %s258
          %s260 = sand.u32 %s44, 1
          %s261 = smul.addr %s260, 16
          %s262 = scalar_lea.vmem [#allocation3], %s261
          %s263 = smul.u32 2, %s29
          %s265 = ssub.s32 256, 256
          %266 = vsyncadd %s259, %s265
          %s267 = smul.addr %s263, 64
          %s268 = scalar_lea.hbm %s0, %s267
          %s269 = sshll.u32 %s262, 4
          %s270 = int_to_ptr.vmem [resolvable:$true] %s269
          %275 = dma.hbm_to_vmem [thread:$0]  %s268, 256, %s270, %s259, 256, 128, 8
        $region32: #{tpu_custom_call.1} parent=27 // pred_fallthru
          _
        // Predicated region
        $region33: #{tpu_custom_call.1} parent=27 // pred_check
          %p276 = pneg %p80
        $region34: #{tpu_custom_call.1} parent=27 // pred_check_branch
          %278 = sbr.rel (%p276) target = $region36
        $region35: #{tpu_custom_call.1} parent=27 // pred_region
          %s279 = sand.u32 %s22, 1
          %s280 = scalar_lea.sflag [#allocation7], %s279
          %s281 = sand.u32 %s70, 1
          %s282 = smul.addr %s281, 384
          %s283 = scalar_lea.vmem [#allocation6], %s282
          %s285 = ssub.s32 6144, 6144
          %286 = vsyncadd %s280, %s285
          %s287 = smul.addr %s30, 96
          %s288 = smul.addr %s287, 64
          %s289 = scalar_lea.hbm %s1, %s288
          %s290 = sshll.u32 %s283, 4
          %s291 = int_to_ptr.vmem [resolvable:$true] %s290
          %296 = dma.hbm_to_vmem [thread:$0]  %s289, 6144, %s291, %s280, 192, 192, 12
        $region36: #{tpu_custom_call.1} parent=27 // pred_fallthru
          _
        // Predicated region
        $region37: #{tpu_custom_call.1} parent=27 // pred_check
          %p297 = pneg %p106
        $region38: #{tpu_custom_call.1} parent=27 // pred_check_branch
          %299 = sbr.rel (%p297) target = $region40
        $region39: #{tpu_custom_call.1} parent=27 // pred_region
          %p300 = scmp.lt.s32.totalorder %s30, 1
          %s301 = scalar_select %p300, %s30, 1
          %s302 = smul.addr %s301, 3
          %s303 = scalar_lea.vmem %s2, %s302
        $region40: #{tpu_custom_call.1} parent=27 // pred_fallthru
          _
        // Predicated region
        $region41: #{tpu_custom_call.1} parent=27 // pred_check
          %p304 = pneg %p132
        $region42: #{tpu_custom_call.1} parent=27 // pred_check_branch
          %306 = sbr.rel (%p304) target = $region44
        $region43: #{tpu_custom_call.1} parent=27 // pred_region
          %s307 = sand.u32 %s22, 1
          %s308 = scalar_lea.sflag [#allocation7], %s307
          %s309 = sand.u32 %s122, 1
          %s310 = smul.addr %s309, 128
          %s311 = scalar_lea.vmem [#allocation8], %s310
          %s313 = ssub.s32 2048, 2048
          %314 = vsyncadd %s308, %s313
          %s315 = smul.addr %s30, 32
          %s316 = smul.addr %s315, 64
          %s317 = scalar_lea.hbm %s3, %s316
          %s318 = sshll.u32 %s311, 4
          %s319 = int_to_ptr.vmem [resolvable:$true] %s318
          %324 = dma.hbm_to_vmem [thread:$0]  %s317, 2048, %s319, %s308, 128, 128, 8
        $region44: #{tpu_custom_call.1} parent=27 // pred_fallthru
          _
      $region28: #{tpu_custom_call.1} parent=5 // pred_fallthru
        _
      %p325 = scmp.le.s32.totalorder 1, %s22
      %p326 = scmp.lt.s32.totalorder %s22, 5
      %p327 = pnand %p325, %p326
      %p328 = pneg %p327
      // Predicated region
      $region45: #{tpu_custom_call.1} parent=5 // pred_check
        _
      $region46: #{tpu_custom_call.1} parent=5 // pred_check_branch
        %330 = sbr.rel (%p327) target = $region48
      $region47: #{tpu_custom_call.1} parent=5 // pred_region
        %s331 = ssub.s32 %s22, 1
        %s332 = sand.u32 %s47, 1
        %s333 = scalar_lea.sflag [#allocation4], %s332
        %s334 = sand.u32 %s47, 1
        %s335 = smul.addr %s334, 16
        %s336 = scalar_lea.vmem [#allocation3], %s335
        // Predicated region
        $region49: #{tpu_custom_call.1} parent=47 // pred_check
          %p337 = pneg %p60
        $region50: #{tpu_custom_call.1} parent=47 // pred_check_branch
          %339 = sbr.rel (%p337) target = $region52
        $region51: #{tpu_custom_call.1} parent=47 // pred_region
          %340 = dma.done %s333, 256
        $region52: #{tpu_custom_call.1} parent=47 // pred_fallthru
          _
        %s341 = sand.u32 %s27, 1
        %s342 = scalar_lea.sflag [#allocation7], %s341
        %s343 = sand.u32 %s73, 1
        %s344 = smul.addr %s343, 384
        %s345 = scalar_lea.vmem [#allocation6], %s344
        // Predicated region
        $region53: #{tpu_custom_call.1} parent=47 // pred_check
          %p346 = pneg %p86
        $region54: #{tpu_custom_call.1} parent=47 // pred_check_branch
          %348 = sbr.rel (%p346) target = $region56
        $region55: #{tpu_custom_call.1} parent=47 // pred_region
          %349 = dma.done %s342, 6144
        $region56: #{tpu_custom_call.1} parent=47 // pred_fallthru
          _
        %s350 = sand.u32 %s27, 1
        %s351 = scalar_lea.sflag [#allocation7], %s350
        %s352 = sand.u32 %s125, 1
        %s353 = smul.addr %s352, 128
        %s354 = scalar_lea.vmem [#allocation8], %s353
        // Predicated region
        $region57: #{tpu_custom_call.1} parent=47 // pred_check
          %p355 = pneg %p138
        $region58: #{tpu_custom_call.1} parent=47 // pred_check_branch
          %357 = sbr.rel (%p355) target = $region60
        $region59: #{tpu_custom_call.1} parent=47 // pred_region
          %358 = dma.done %s351, 2048
        $region60: #{tpu_custom_call.1} parent=47 // pred_fallthru
          _
        %s359 = sand.u32 %s47, 1
        %s360 = scalar_lea.sflag [#allocation4], %s359
        %s361 = sand.u32 %s47, 1
        %s362 = smul.addr %s361, 16
        %s363 = scalar_lea.vmem [#allocation3], %s362
        %p364 = pneg %p60
        %p365 = pneg %p57
        %s366 = sand.u32 %s27, 1
        %s367 = scalar_lea.sflag [#allocation7], %s366
        %s368 = sand.u32 %s73, 1
        %s369 = smul.addr %s368, 384
        %s370 = scalar_lea.vmem [#allocation6], %s369
        %p371 = pneg %p86
        %p372 = pneg %p83
        %p373 = scmp.lt.s32.totalorder %s32, 1
        %s374 = scalar_select %p373, %s32, 1
        %s375 = smul.addr %s374, 3
        %s376 = scalar_lea.vmem %s2, %s375
        %p377 = pneg %p112
        %p378 = pneg %p109
        %s379 = sand.u32 %s27, 1
        %s380 = scalar_lea.sflag [#allocation7], %s379
        %s381 = sand.u32 %s125, 1
        %s382 = smul.addr %s381, 128
        %s383 = scalar_lea.vmem [#allocation8], %s382
        %p384 = pneg %p138
        %p385 = pneg %p135
        %p386 = pneg %p159
        %p387 = pneg %p156
        %p388 = pneg %p180
        %p389 = pneg %p177
        %p390 = pneg %p201
        %p391 = pneg %p198
        %p392 = pneg %p227
        %p393 = pneg %p224
        %s394 = sand.u32 %s214, 1
        %s395 = scalar_lea.sflag [#allocation5], %s394
        %s396 = sand.u32 %s214, 1
        %s397 = smul.addr %s396, 16
        %s398 = scalar_lea.vmem [#allocation9], %s397
        %s399 = smul.u32 2, %s31
        %p400 = scmp.lt.s32.totalorder %s32, 1
        %s401 = scalar_select %p400, %s32, 1
        %s402 = smul.addr %s401, 3
        %s403 = scalar_lea.vmem %s2, %s402
        %v405 = vld [vmem:[%s336] sm:$0xff]
        %v406 = vld [vmem:[%s336 + $0x8] sm:$0xff]
        %p407 = scmp.eq.s32.totalorder %s32, 0
        // Predicated region
        $region61: #{tpu_custom_call.1} parent=47 // pred_check
          %p408 = pneg %p407
        $region62: #{tpu_custom_call.1} parent=47 // pred_check_branch
          %410 = sbr.rel (%p408) target = $region64
        $region63: #{tpu_custom_call.1} parent=47 // pred_region
          %411 = vst [vmem:[#allocation2] sm:$0xff] 0.0
          %412 = vst [vmem:[#allocation2 + $0x8] sm:$0xff] 0.0
          %413 = vst [vmem:[#allocation2 + $0x10] sm:$0xff] 0.0
          %414 = vst [vmem:[#allocation2 + $0x18] sm:$0xff] 0.0
        $region64: #{tpu_custom_call.1} parent=47 // pred_fallthru
          _
        %v415 = vld [vmem:[%s345] sm:$0xff]
        %v416 = vld [vmem:[%s345 + $0x8] sm:$0xf]
        %v417 = vld [vmem:[%s345 + $0xc] sm:$0xff]
        %v418 = vld [vmem:[%s345 + $0x14] sm:$0xf]
        %v419 = vld [vmem:[%s345 + $0x18] sm:$0xff]
        %v420 = vld [vmem:[%s345 + $0x20] sm:$0xf]
        %v421 = vld [vmem:[%s345 + $0x24] sm:$0xff]
        %v422 = vld [vmem:[%s345 + $0x2c] sm:$0xf]
        %v423 = vld [vmem:[%s345 + $0x30] sm:$0xff]
        %v424 = vld [vmem:[%s345 + $0x38] sm:$0xf]
        %v425 = vld [vmem:[%s345 + $0x3c] sm:$0xff]
        %v426 = vld [vmem:[%s345 + $0x44] sm:$0xf]
        %v427 = vld [vmem:[%s345 + $0x48] sm:$0xff]
        %v428 = vld [vmem:[%s345 + $0x50] sm:$0xf]
        %v429 = vld [vmem:[%s345 + $0x54] sm:$0xff]
        %v430 = vld [vmem:[%s345 + $0x5c] sm:$0xf]
        %v431 = vld [vmem:[%s345 + $0x60] sm:$0xff]
        %v432 = vld [vmem:[%s345 + $0x68] sm:$0xf]
        %v433 = vld [vmem:[%s345 + $0x6c] sm:$0xff]
        %v434 = vld [vmem:[%s345 + $0x74] sm:$0xf]
        %v435 = vld [vmem:[%s345 + $0x78] sm:$0xff]
        %v436 = vld [vmem:[%s345 + $0x80] sm:$0xf]
        %v437 = vld [vmem:[%s345 + $0x84] sm:$0xff]
        %v438 = vld [vmem:[%s345 + $0x8c] sm:$0xf]
        %v439 = vld [vmem:[%s345 + $0x90] sm:$0xff]
        %v440 = vld [vmem:[%s345 + $0x98] sm:$0xf]
        %v441 = vld [vmem:[%s345 + $0x9c] sm:$0xff]
        %v442 = vld [vmem:[%s345 + $0xa4] sm:$0xf]
        %v443 = vld [vmem:[%s345 + $0xa8] sm:$0xff]
        %v444 = vld [vmem:[%s345 + $0xb0] sm:$0xf]
        %v445 = vld [vmem:[%s345 + $0xb4] sm:$0xff]
        %v446 = vld [vmem:[%s345 + $0xbc] sm:$0xf]
        %v447 = vld [vmem:[%s345 + $0xc0] sm:$0xff]
        %v448 = vld [vmem:[%s345 + $0xc8] sm:$0xf]
        %v449 = vld [vmem:[%s345 + $0xcc] sm:$0xff]
        %v450 = vld [vmem:[%s345 + $0xd4] sm:$0xf]
        %v451 = vld [vmem:[%s345 + $0xd8] sm:$0xff]
        %v452 = vld [vmem:[%s345 + $0xe0] sm:$0xf]
        %v453 = vld [vmem:[%s345 + $0xe4] sm:$0xff]
        %v454 = vld [vmem:[%s345 + $0xec] sm:$0xf]
        %v455 = vld [vmem:[%s345 + $0xf0] sm:$0xff]
        %v456 = vld [vmem:[%s345 + $0xf8] sm:$0xf]
        %v457 = vld [vmem:[%s345 + $0xfc] sm:$0xff]
        %v458 = vld [vmem:[%s345 + $0x104] sm:$0xf]
        %v459 = vld [vmem:[%s345 + $0x108] sm:$0xff]
        %v460 = vld [vmem:[%s345 + $0x110] sm:$0xf]
        %v461 = vld [vmem:[%s345 + $0x114] sm:$0xff]
        %v462 = vld [vmem:[%s345 + $0x11c] sm:$0xf]
        %v463 = vld [vmem:[%s345 + $0x120] sm:$0xff]
        %v464 = vld [vmem:[%s345 + $0x128] sm:$0xf]
        %v465 = vld [vmem:[%s345 + $0x12c] sm:$0xff]
        %v466 = vld [vmem:[%s345 + $0x134] sm:$0xf]
        %v467 = vld [vmem:[%s345 + $0x138] sm:$0xff]
        %v468 = vld [vmem:[%s345 + $0x140] sm:$0xf]
        %v469 = vld [vmem:[%s345 + $0x144] sm:$0xff]
        %v470 = vld [vmem:[%s345 + $0x14c] sm:$0xf]
        %v471 = vld [vmem:[%s345 + $0x150] sm:$0xff]
        %v472 = vld [vmem:[%s345 + $0x158] sm:$0xf]
        %v473 = vld [vmem:[%s345 + $0x15c] sm:$0xff]
        %v474 = vld [vmem:[%s345 + $0x164] sm:$0xf]
        %v475 = vld [vmem:[%s345 + $0x168] sm:$0xff]
        %v476 = vld [vmem:[%s345 + $0x170] sm:$0xf]
        %v477 = vld [vmem:[%s345 + $0x174] sm:$0xff]
        %v478 = vld [vmem:[%s345 + $0x17c] sm:$0xf]
        %v479 = vld [vmem:[%s403] sm:$0x7]
        %v480 = vunpack.c.l.bf16 %v479
        %v482 = vlaneseq
        %v483 = vshrl.u32 %v482, 7
        %v484 = vsub.s32 0, %v483
        %v485 = vrot.slane %v480, %v484
        %v486 = vlaneseq
        %v487 = vshrl.u32 %v486, 7
        %v488 = vsub.s32 2, %v487
        %v489 = vrot.slane %v480, %v488
        %v490 = vlaneseq
        %v491 = vshrl.u32 %v490, 7
        %v492 = vsub.s32 4, %v491
        %v493 = vrot.slane %v480, %v492
        %v497 = vlaneseq
        %v498 = vshrl.u32 %v497, 7
        %v499 = vsub.s32 0, %v498
        %v500 = vrot.slane %v485, %v499
        %v501 = vlaneseq
        %v502 = vshrl.u32 %v501, 7
        %v503 = vsub.s32 0, %v502
        %v504 = vrot.slane %v489, %v503
        %v505 = vlaneseq
        %v506 = vshrl.u32 %v505, 7
        %v507 = vsub.s32 0, %v506
        %v508 = vrot.slane %v493, %v507
        %v511 = vunpack.c.l.b16 %v405
        %v512 = vunpack.c.h.b16 %v405
        %v513 = vunpack.c.l.b16 %v406
        %v514 = vunpack.c.h.b16 %v406
        %v515 = vpack.c.b16 %v513, %v511
        %v516 = vpack.c.b16 %v514, %v512
        %v583 = vunpack.c.l.b16 %v415
        %v584 = vunpack.c.h.b16 %v415
        %v585 = vunpack.c.l.b16 %v416
        %v586 = vunpack.c.l.b16 %v417
        %v587 = vunpack.c.h.b16 %v417
        %v588 = vunpack.c.l.b16 %v418
        %v589 = vunpack.c.l.b16 %v419
        %v590 = vunpack.c.h.b16 %v419
        %v591 = vunpack.c.l.b16 %v420
        %v592 = vunpack.c.l.b16 %v421
        %v593 = vunpack.c.h.b16 %v421
        %v594 = vunpack.c.l.b16 %v422
        %v595 = vunpack.c.l.b16 %v423
        %v596 = vunpack.c.h.b16 %v423
        %v597 = vunpack.c.l.b16 %v424
        %v598 = vunpack.c.l.b16 %v425
        %v599 = vunpack.c.h.b16 %v425
        %v600 = vunpack.c.l.b16 %v426
        %v601 = vunpack.c.l.b16 %v427
        %v602 = vunpack.c.h.b16 %v427
        %v603 = vunpack.c.l.b16 %v428
        %v604 = vunpack.c.l.b16 %v429
        %v605 = vunpack.c.h.b16 %v429
        %v606 = vunpack.c.l.b16 %v430
        %v607 = vunpack.c.l.b16 %v431
        %v608 = vunpack.c.h.b16 %v431
        %v609 = vunpack.c.l.b16 %v432
        %v610 = vunpack.c.l.b16 %v433
        %v611 = vunpack.c.h.b16 %v433
        %v612 = vunpack.c.l.b16 %v434
        %v613 = vunpack.c.l.b16 %v435
        %v614 = vunpack.c.h.b16 %v435
        %v615 = vunpack.c.l.b16 %v436
        %v616 = vunpack.c.l.b16 %v437
        %v617 = vunpack.c.h.b16 %v437
        %v618 = vunpack.c.l.b16 %v438
        %v619 = vunpack.c.l.b16 %v439
        %v620 = vunpack.c.h.b16 %v439
        %v621 = vunpack.c.l.b16 %v440
        %v622 = vunpack.c.l.b16 %v441
        %v623 = vunpack.c.h.b16 %v441
        %v624 = vunpack.c.l.b16 %v442
        %v625 = vunpack.c.l.b16 %v443
        %v626 = vunpack.c.h.b16 %v443
        %v627 = vunpack.c.l.b16 %v444
        %v628 = vunpack.c.l.b16 %v445
        %v629 = vunpack.c.h.b16 %v445
        %v630 = vunpack.c.l.b16 %v446
        %v631 = vunpack.c.l.b16 %v447
        %v632 = vunpack.c.h.b16 %v447
        %v633 = vunpack.c.l.b16 %v448
        %v634 = vunpack.c.l.b16 %v449
        %v635 = vunpack.c.h.b16 %v449
        %v636 = vunpack.c.l.b16 %v450
        %v637 = vunpack.c.l.b16 %v451
        %v638 = vunpack.c.h.b16 %v451
        %v639 = vunpack.c.l.b16 %v452
        %v640 = vunpack.c.l.b16 %v453
        %v641 = vunpack.c.h.b16 %v453
        %v642 = vunpack.c.l.b16 %v454
        %v643 = vunpack.c.l.b16 %v455
        %v644 = vunpack.c.h.b16 %v455
        %v645 = vunpack.c.l.b16 %v456
        %v646 = vunpack.c.l.b16 %v457
        %v647 = vunpack.c.h.b16 %v457
        %v648 = vunpack.c.l.b16 %v458
        %v649 = vunpack.c.l.b16 %v459
        %v650 = vunpack.c.h.b16 %v459
        %v651 = vunpack.c.l.b16 %v460
        %v652 = vunpack.c.l.b16 %v461
        %v653 = vunpack.c.h.b16 %v461
        %v654 = vunpack.c.l.b16 %v462
        %v655 = vunpack.c.l.b16 %v463
        %v656 = vunpack.c.h.b16 %v463
        %v657 = vunpack.c.l.b16 %v464
        %v658 = vunpack.c.l.b16 %v465
        %v659 = vunpack.c.h.b16 %v465
        %v660 = vunpack.c.l.b16 %v466
        %v661 = vunpack.c.l.b16 %v467
        %v662 = vunpack.c.h.b16 %v467
        %v663 = vunpack.c.l.b16 %v468
        %v664 = vunpack.c.l.b16 %v469
        %v665 = vunpack.c.h.b16 %v469
        %v666 = vunpack.c.l.b16 %v470
        %v667 = vunpack.c.l.b16 %v471
        %v668 = vunpack.c.h.b16 %v471
        %v669 = vunpack.c.l.b16 %v472
        %v670 = vunpack.c.l.b16 %v473
        %v671 = vunpack.c.h.b16 %v473
        %v672 = vunpack.c.l.b16 %v474
        %v673 = vunpack.c.l.b16 %v475
        %v674 = vunpack.c.h.b16 %v475
        %v675 = vunpack.c.l.b16 %v476
        %v676 = vunpack.c.l.b16 %v477
        %v677 = vunpack.c.h.b16 %v477
        %v678 = vunpack.c.l.b16 %v478
        %v679 = vpack.c.b16 %v586, %v583
        %v680 = vpack.c.b16 %v587, %v584
        %v681 = vpack.c.b16 %v588, %v585
        %v682 = vpack.c.b16 %v592, %v589
        %v683 = vpack.c.b16 %v593, %v590
        %v684 = vpack.c.b16 %v594, %v591
        %v685 = vpack.c.b16 %v598, %v595
        %v686 = vpack.c.b16 %v599, %v596
        %v687 = vpack.c.b16 %v600, %v597
        %v688 = vpack.c.b16 %v604, %v601
        %v689 = vpack.c.b16 %v605, %v602
        %v690 = vpack.c.b16 %v606, %v603
        %v691 = vpack.c.b16 %v610, %v607
        %v692 = vpack.c.b16 %v611, %v608
        %v693 = vpack.c.b16 %v612, %v609
        %v694 = vpack.c.b16 %v616, %v613
        %v695 = vpack.c.b16 %v617, %v614
        %v696 = vpack.c.b16 %v618, %v615
        %v697 = vpack.c.b16 %v622, %v619
        %v698 = vpack.c.b16 %v623, %v620
        %v699 = vpack.c.b16 %v624, %v621
        %v700 = vpack.c.b16 %v628, %v625
        %v701 = vpack.c.b16 %v629, %v626
        %v702 = vpack.c.b16 %v630, %v627
        %v703 = vpack.c.b16 %v634, %v631
        %v704 = vpack.c.b16 %v635, %v632
        %v705 = vpack.c.b16 %v636, %v633
        %v706 = vpack.c.b16 %v640, %v637
        %v707 = vpack.c.b16 %v641, %v638
        %v708 = vpack.c.b16 %v642, %v639
        %v709 = vpack.c.b16 %v646, %v643
        %v710 = vpack.c.b16 %v647, %v644
        %v711 = vpack.c.b16 %v648, %v645
        %v712 = vpack.c.b16 %v652, %v649
        %v713 = vpack.c.b16 %v653, %v650
        %v714 = vpack.c.b16 %v654, %v651
        %v715 = vpack.c.b16 %v658, %v655
        %v716 = vpack.c.b16 %v659, %v656
        %v717 = vpack.c.b16 %v660, %v657
        %v718 = vpack.c.b16 %v664, %v661
        %v719 = vpack.c.b16 %v665, %v662
        %v720 = vpack.c.b16 %v666, %v663
        %v721 = vpack.c.b16 %v670, %v667
        %v722 = vpack.c.b16 %v671, %v668
        %v723 = vpack.c.b16 %v672, %v669
        %v724 = vpack.c.b16 %v676, %v673
        %v725 = vpack.c.b16 %v677, %v674
        %v726 = vpack.c.b16 %v678, %v675
        %775 = vmatprep.subr.bf16.mxu0 %v701
        %776 = vmatpush1.bf16.msra.mxu0 %v700
        %777 = vmatprep.subr.bf16.mxu0 %v698
        %778 = vmatpush1.bf16.msra.mxu0 %v697
        %779 = vmatprep.subr.bf16.mxu0 %v695
        %780 = vmatpush1.bf16.msra.mxu0 %v694
        %781 = vmatprep.subr.bf16.mxu0 %v692
        %782 = vmatpush1.bf16.msra.mxu0 %v691
        %783 = vmatprep.subr.bf16.mxu0 %v689
        %784 = vmatpush1.bf16.msra.mxu0 %v688
        %785 = vmatprep.subr.bf16.mxu0 %v686
        %786 = vmatpush1.bf16.msra.mxu0 %v685
        %787 = vmatprep.subr.bf16.mxu0 %v683
        %788 = vmatpush1.bf16.msra.mxu0 %v682
        %789 = vmatprep.subr.bf16.mxu0 %v680
        %790 = vmatpush1.bf16.msra.mxu0 %v679
        %791 = vmatprep.subr.bf16.mxu0 %v725
        %792 = vmatpush2.bf16.msra.mxu0 %v724
        %793 = vmatprep.subr.bf16.mxu0 %v722
        %794 = vmatpush2.bf16.msra.mxu0 %v721
        %795 = vmatprep.subr.bf16.mxu0 %v719
        %796 = vmatpush2.bf16.msra.mxu0 %v718
        %797 = vmatprep.subr.bf16.mxu0 %v716
        %798 = vmatpush2.bf16.msra.mxu0 %v715
        %799 = vmatprep.subr.bf16.mxu0 %v713
        %800 = vmatpush2.bf16.msra.mxu0 %v712
        %801 = vmatprep.subr.bf16.mxu0 %v710
        %802 = vmatpush2.bf16.msra.mxu0 %v709
        %803 = vmatprep.subr.bf16.mxu0 %v707
        %804 = vmatpush2.bf16.msra.mxu0 %v706
        %805 = vmatprep.subr.bf16.mxu0 %v704
        %806 = vmatpush2.bf16.msra.mxu0 %v703
        %807 = vmatprep.mubr.bf16.mxu0 %v516
        %808 = vmatmul.mubr.bf16.gmra.mxu0 %v515
        %v809 = vpop.f32.mrf.mxu0
        %v810 = vadd.f32 %v500, %v809
        %v811 = vpop.f32.mrf.mxu0
        %v812 = vadd.f32 %v504, %v811
        %v813 = vpop.f32.mrf.mxu0
        %v814 = vadd.f32 %v500, %v813
        %v815 = vpop.f32.mrf.mxu0
        %v816 = vadd.f32 %v504, %v815
        %817 = vdwg.mxu0
        %818 = vmatprep.subr.bf16.mxu0 0
        %819 = vmatpush1.bf16.msra.mxu0 %v702
        %820 = vmatprep.subr.bf16.mxu0 0
        %821 = vmatpush1.bf16.msra.mxu0 %v699
        %822 = vmatprep.subr.bf16.mxu0 0
        %823 = vmatpush1.bf16.msra.mxu0 %v696
        %824 = vmatprep.subr.bf16.mxu0 0
        %825 = vmatpush1.bf16.msra.mxu0 %v693
        %826 = vmatprep.subr.bf16.mxu0 0
        %827 = vmatpush1.bf16.msra.mxu0 %v690
        %828 = vmatprep.subr.bf16.mxu0 0
        %829 = vmatpush1.bf16.msra.mxu0 %v687
        %830 = vmatprep.subr.bf16.mxu0 0
        %831 = vmatpush1.bf16.msra.mxu0 %v684
        %832 = vmatprep.subr.bf16.mxu0 0
        %833 = vmatpush1.bf16.msra.mxu0 %v681
        %834 = vmatprep.subr.bf16.mxu0 0
        %835 = vmatpush2.bf16.msra.mxu0 %v726
        %836 = vmatprep.subr.bf16.mxu0 0
        %837 = vmatpush2.bf16.msra.mxu0 %v723
        %838 = vmatprep.subr.bf16.mxu0 0
        %839 = vmatpush2.bf16.msra.mxu0 %v720
        %840 = vmatprep.subr.bf16.mxu0 0
        %841 = vmatpush2.bf16.msra.mxu0 %v717
        %842 = vmatprep.subr.bf16.mxu0 0
        %843 = vmatpush2.bf16.msra.mxu0 %v714
        %844 = vmatprep.subr.bf16.mxu0 0
        %845 = vmatpush2.bf16.msra.mxu0 %v711
        %846 = vmatprep.subr.bf16.mxu0 0
        %847 = vmatpush2.bf16.msra.mxu0 %v708
        %848 = vmatprep.subr.bf16.mxu0 0
        %849 = vmatpush2.bf16.msra.mxu0 %v705
        %850 = vmatprep.mubr.bf16.mxu0 %v516
        %851 = vmatmul.mubr.bf16.gmra.mxu0 %v515
        %v852 = vpop.f32.mrf.mxu0
        %v853 = vadd.f32 %v508, %v852
        %v854 = vpop.f32.mrf.mxu0
        %v855 = vpop.f32.mrf.mxu0
        %v856 = vadd.f32 %v508, %v855
        %v857 = vpop.f32.mrf.mxu0
        %858 = vdwg.mxu0
        %v859 = vmul.f32 %v810, 0.088388346
        %v860 = vmul.f32 %v814, 0.088388346
        %v861 = vpack.c.bf16 %v860, %v859
        %v862 = vpack.c.bf16 %v816, %v812
        %v863 = vpack.c.bf16 %v856, %v853
        %864 = vmatprep.subr.bf16.mxu0 0
        %865 = vmatpush1.bf16.xpose.msra.mxu0 0
        %866 = vmatprep.subr.bf16.mxu0 0
        %867 = vmatpush1.bf16.xpose.msra.mxu0 0
        %868 = vmatprep.subr.bf16.mxu0 0
        %869 = vmatpush1.bf16.xpose.msra.mxu0 0
        %870 = vmatprep.subr.bf16.mxu0 0
        %871 = vmatpush1.bf16.xpose.msra.mxu0 0
        %872 = vmatprep.subr.bf16.mxu0 0
        %873 = vmatpush1.bf16.xpose.msra.mxu0 0
        %874 = vmatprep.subr.bf16.mxu0 0
        %875 = vmatpush1.bf16.xpose.msra.mxu0 0
        %876 = vmatprep.subr.bf16.mxu0 0
        %877 = vmatpush1.bf16.xpose.msra.mxu0 0
        %878 = vmatprep.subr.bf16.mxu0 0
        %879 = vmatpush1.bf16.xpose.msra.mxu0 %v862
        %880 = vmatprep.subr.bf16.mxu0 0
        %881 = vmatpush2.bf16.xpose.msra.mxu0 0
        %882 = vmatprep.subr.bf16.mxu0 0
        %883 = vmatpush2.bf16.xpose.msra.mxu0 0
        %884 = vmatprep.subr.bf16.mxu0 0
        %885 = vmatpush2.bf16.xpose.msra.mxu0 0
        %886 = vmatprep.subr.bf16.mxu0 0
        %887 = vmatpush2.bf16.xpose.msra.mxu0 0
        %888 = vmatprep.subr.bf16.mxu0 0
        %889 = vmatpush2.bf16.xpose.msra.mxu0 0
        %890 = vmatprep.subr.bf16.mxu0 0
        %891 = vmatpush2.bf16.xpose.msra.mxu0 0
        %892 = vmatprep.subr.bf16.mxu0 0
        %893 = vmatpush2.bf16.xpose.msra.mxu0 0
        %894 = vmatprep.subr.bf16.mxu0 0
        %895 = vmatpush2.bf16.xpose.msra.mxu0 0
        %896 = vmatprep.mubr.bf16.mxu0 0
        %897 = vmatmul.mubr.bf16.gmra.mxu0 %v861
        %v898 = vpop.f32.mrf.mxu0
        %v899 = vadd.f32 0.0, %v898
        %v900 = vpop.f32.mrf.mxu0
        %v901 = vpop.f32.mrf.mxu0
        %v902 = vadd.f32 0.0, %v901
        %v903 = vpop.f32.mrf.mxu0
        %904 = vdwg.mxu0
        %vm905 = vcmask 130048
        %v906 = vsel %vm905, %v899, -inf
        %907 = vmax.xlane.f32.xlu0 %v906
        %v908 = vpop.xlane.xlu0 %907
        %v909 = vsel %vm905, %v902, -inf
        %910 = vmax.xlane.f32.xlu0 %v909
        %v911 = vpop.xlane.xlu0 %910
        %v912 = vsub.f32 %v899, %v908
        %v913 = vsub.f32 %v902, %v911
        %v914 = vmul.f32 %v912, 1.442695
        %v915 = vpow.pop %v914
        %v916 = vmul.f32 %v913, 1.442695
        %v917 = vpow.pop %v916
        %v918 = vsel %vm905, %v915, 0.0
        %919 = vadd.xlane.f32.xlu0 %v918
        %v920 = vpop.xlane.xlu0 %919
        %v921 = vsel %vm905, %v917, 0.0
        %922 = vadd.xlane.f32.xlu0 %v921
        %v923 = vpop.xlane.xlu0 %922
        %v924 = vrcp.pop %v920
        %v925 = vrcp.pop %v923
        %v926 = vmul.f32 %v915, %v924
        %v927 = vmul.f32 %v917, %v925
        %v928 = vpack.c.bf16 %v927, %v926
        %v930 = vsel %vm905, %v928, 0
        %932 = vmatprep.subr.bf16.mxu0 0
        %933 = vmatpush1.bf16.msra.mxu0 0
        %934 = vmatprep.subr.bf16.mxu0 0
        %935 = vmatpush1.bf16.msra.mxu0 0
        %936 = vmatprep.subr.bf16.mxu0 0
        %937 = vmatpush1.bf16.msra.mxu0 0
        %938 = vmatprep.subr.bf16.mxu0 0
        %939 = vmatpush1.bf16.msra.mxu0 0
        %940 = vmatprep.subr.bf16.mxu0 0
        %941 = vmatpush1.bf16.msra.mxu0 0
        %942 = vmatprep.subr.bf16.mxu0 0
        %943 = vmatpush1.bf16.msra.mxu0 0
        %944 = vmatprep.subr.bf16.mxu0 0
        %945 = vmatpush1.bf16.msra.mxu0 0
        %946 = vmatprep.subr.bf16.mxu0 0
        %947 = vmatpush1.bf16.msra.mxu0 %v863
        %948 = vmatprep.subr.bf16.mxu0 0
        %949 = vmatpush2.bf16.msra.mxu0 0
        %950 = vmatprep.subr.bf16.mxu0 0
        %951 = vmatpush2.bf16.msra.mxu0 0
        %952 = vmatprep.subr.bf16.mxu0 0
        %953 = vmatpush2.bf16.msra.mxu0 0
        %954 = vmatprep.subr.bf16.mxu0 0
        %955 = vmatpush2.bf16.msra.mxu0 0
        %956 = vmatprep.subr.bf16.mxu0 0
        %957 = vmatpush2.bf16.msra.mxu0 0
        %958 = vmatprep.subr.bf16.mxu0 0
        %959 = vmatpush2.bf16.msra.mxu0 0
        %960 = vmatprep.subr.bf16.mxu0 0
        %961 = vmatpush2.bf16.msra.mxu0 0
        %962 = vmatprep.subr.bf16.mxu0 0
        %963 = vmatpush2.bf16.msra.mxu0 0
        %964 = vmatprep.mubr.bf16.mxu0 0
        %965 = vmatmul.mubr.bf16.gmra.mxu0 %v930
        %v966 = vpop.f32.mrf.mxu0
        %v967 = vadd.f32 0.0, %v966
        %v968 = vpop.f32.mrf.mxu0
        %v969 = vpop.f32.mrf.mxu0
        %v970 = vadd.f32 0.0, %v969
        %v971 = vpop.f32.mrf.mxu0
        %972 = vdwg.mxu0
        %v973 = vld [vmem:[#allocation2] sm:$0xff]
        %v974 = vld [vmem:[#allocation2 + $0x8] sm:$0xff]
        %v975 = vld [vmem:[#allocation2 + $0x10] sm:$0xff]
        %v976 = vld [vmem:[#allocation2 + $0x18] sm:$0xff]
        %v977 = vpack.c.bf16 %v970, %v967
        %v978 = vld [vmem:[%s354] sm:$0xff]
        %v979 = vld [vmem:[%s354 + $0x8] sm:$0xff]
        %v980 = vld [vmem:[%s354 + $0x10] sm:$0xff]
        %v981 = vld [vmem:[%s354 + $0x18] sm:$0xff]
        %v982 = vld [vmem:[%s354 + $0x20] sm:$0xff]
        %v983 = vld [vmem:[%s354 + $0x28] sm:$0xff]
        %v984 = vld [vmem:[%s354 + $0x30] sm:$0xff]
        %v985 = vld [vmem:[%s354 + $0x38] sm:$0xff]
        %v986 = vld [vmem:[%s354 + $0x40] sm:$0xff]
        %v987 = vld [vmem:[%s354 + $0x48] sm:$0xff]
        %v988 = vld [vmem:[%s354 + $0x50] sm:$0xff]
        %v989 = vld [vmem:[%s354 + $0x58] sm:$0xff]
        %v990 = vld [vmem:[%s354 + $0x60] sm:$0xff]
        %v991 = vld [vmem:[%s354 + $0x68] sm:$0xff]
        %v992 = vld [vmem:[%s354 + $0x70] sm:$0xff]
        %v993 = vld [vmem:[%s354 + $0x78] sm:$0xff]
        %v1010 = vunpack.c.l.b16 %v978
        %v1011 = vunpack.c.h.b16 %v978
        %v1012 = vunpack.c.l.b16 %v979
        %v1013 = vunpack.c.h.b16 %v979
        %v1014 = vunpack.c.l.b16 %v980
        %v1015 = vunpack.c.h.b16 %v980
        %v1016 = vunpack.c.l.b16 %v981
        %v1017 = vunpack.c.h.b16 %v981
        %v1018 = vunpack.c.l.b16 %v982
        %v1019 = vunpack.c.h.b16 %v982
        %v1020 = vunpack.c.l.b16 %v983
        %v1021 = vunpack.c.h.b16 %v983
        %v1022 = vunpack.c.l.b16 %v984
        %v1023 = vunpack.c.h.b16 %v984
        %v1024 = vunpack.c.l.b16 %v985
        %v1025 = vunpack.c.h.b16 %v985
        %v1026 = vunpack.c.l.b16 %v986
        %v1027 = vunpack.c.h.b16 %v986
        %v1028 = vunpack.c.l.b16 %v987
        %v1029 = vunpack.c.h.b16 %v987
        %v1030 = vunpack.c.l.b16 %v988
        %v1031 = vunpack.c.h.b16 %v988
        %v1032 = vunpack.c.l.b16 %v989
        %v1033 = vunpack.c.h.b16 %v989
        %v1034 = vunpack.c.l.b16 %v990
        %v1035 = vunpack.c.h.b16 %v990
        %v1036 = vunpack.c.l.b16 %v991
        %v1037 = vunpack.c.h.b16 %v991
        %v1038 = vunpack.c.l.b16 %v992
        %v1039 = vunpack.c.h.b16 %v992
        %v1040 = vunpack.c.l.b16 %v993
        %v1041 = vunpack.c.h.b16 %v993
        %v1042 = vpack.c.b16 %v1012, %v1010
        %v1043 = vpack.c.b16 %v1013, %v1011
        %v1044 = vpack.c.b16 %v1016, %v1014
        %v1045 = vpack.c.b16 %v1017, %v1015
        %v1046 = vpack.c.b16 %v1020, %v1018
        %v1047 = vpack.c.b16 %v1021, %v1019
        %v1048 = vpack.c.b16 %v1024, %v1022
        %v1049 = vpack.c.b16 %v1025, %v1023
        %v1050 = vpack.c.b16 %v1028, %v1026
        %v1051 = vpack.c.b16 %v1029, %v1027
        %v1052 = vpack.c.b16 %v1032, %v1030
        %v1053 = vpack.c.b16 %v1033, %v1031
        %v1054 = vpack.c.b16 %v1036, %v1034
        %v1055 = vpack.c.b16 %v1037, %v1035
        %v1056 = vpack.c.b16 %v1040, %v1038
        %v1057 = vpack.c.b16 %v1041, %v1039
        %1074 = vmatprep.subr.bf16.mxu0 %v1057
        %1075 = vmatpush1.bf16.msra.mxu0 %v1056
        %1076 = vmatprep.subr.bf16.mxu0 %v1055
        %1077 = vmatpush1.bf16.msra.mxu0 %v1054
        %1078 = vmatprep.subr.bf16.mxu0 %v1053
        %1079 = vmatpush1.bf16.msra.mxu0 %v1052
        %1080 = vmatprep.subr.bf16.mxu0 %v1051
        %1081 = vmatpush1.bf16.msra.mxu0 %v1050
        %1082 = vmatprep.subr.bf16.mxu0 %v1049
        %1083 = vmatpush1.bf16.msra.mxu0 %v1048
        %1084 = vmatprep.subr.bf16.mxu0 %v1047
        %1085 = vmatpush1.bf16.msra.mxu0 %v1046
        %1086 = vmatprep.subr.bf16.mxu0 %v1045
        %1087 = vmatpush1.bf16.msra.mxu0 %v1044
        %1088 = vmatprep.subr.bf16.mxu0 %v1043
        %1089 = vmatpush1.bf16.msra.mxu0 %v1042
        %1090 = vmatprep.subr.bf16.mxu0 0
        %1091 = vmatpush2.bf16.msra.mxu0 0
        %1092 = vmatprep.subr.bf16.mxu0 0
        %1093 = vmatpush2.bf16.msra.mxu0 0
        %1094 = vmatprep.subr.bf16.mxu0 0
        %1095 = vmatpush2.bf16.msra.mxu0 0
        %1096 = vmatprep.subr.bf16.mxu0 0
        %1097 = vmatpush2.bf16.msra.mxu0 0
        %1098 = vmatprep.subr.bf16.mxu0 0
        %1099 = vmatpush2.bf16.msra.mxu0 0
        %1100 = vmatprep.subr.bf16.mxu0 0
        %1101 = vmatpush2.bf16.msra.mxu0 0
        %1102 = vmatprep.subr.bf16.mxu0 0
        %1103 = vmatpush2.bf16.msra.mxu0 0
        %1104 = vmatprep.subr.bf16.mxu0 0
        %1105 = vmatpush2.bf16.msra.mxu0 0
        %1106 = vmatprep.mubr.bf16.mxu0 0
        %1107 = vmatmul.mubr.bf16.gmra.mxu0 %v977
        %v1108 = vpop.f32.mrf.mxu0
        %v1109 = vadd.f32 0.0, %v1108
        %v1110 = vpop.f32.mrf.mxu0
        %v1111 = vadd.f32 0.0, %v1110
        %v1112 = vpop.f32.mrf.mxu0
        %v1113 = vadd.f32 0.0, %v1112
        %v1114 = vpop.f32.mrf.mxu0
        %v1115 = vadd.f32 0.0, %v1114
        %1116 = vdwg.mxu0
        %v1117 = vadd.f32 %v973, %v1109
        %v1118 = vadd.f32 %v974, %v1111
        %v1119 = vadd.f32 %v975, %v1113
        %v1120 = vadd.f32 %v976, %v1115
        %1121 = vst [vmem:[#allocation2] sm:$0xff] %v1117
        %1122 = vst [vmem:[#allocation2 + $0x8] sm:$0xff] %v1118
        %1123 = vst [vmem:[#allocation2 + $0x10] sm:$0xff] %v1119
        %1124 = vst [vmem:[#allocation2 + $0x18] sm:$0xff] %v1120
        %p1125 = scmp.eq.s32.totalorder %s32, 1
        // Predicated region
        $region65: #{tpu_custom_call.1} parent=47 // pred_check
          %p1126 = pneg %p1125
        $region66: #{tpu_custom_call.1} parent=47 // pred_check_branch
          %1128 = sbr.rel (%p1126) target = $region68
        $region67: #{tpu_custom_call.1} parent=47 // pred_region
          %v1129 = vld [vmem:[#allocation2] sm:$0xff]
          %v1130 = vld [vmem:[#allocation2 + $0x8] sm:$0xff]
          %v1131 = vld [vmem:[#allocation2 + $0x10] sm:$0xff]
          %v1132 = vld [vmem:[#allocation2 + $0x18] sm:$0xff]
          %v1133 = vld [vmem:[%s4] sm:$0x3]
          %v1134 = vunpack.c.l.bf16 %v1133
          %v1136 = vlaneseq
          %v1137 = vshrl.u32 %v1136, 7
          %v1138 = vsub.s32 0, %v1137
          %v1139 = vrot.slane %v1134, %v1138
          %v1140 = vlaneseq
          %v1141 = vshrl.u32 %v1140, 7
          %v1142 = vsub.s32 2, %v1141
          %v1143 = vrot.slane %v1134, %v1142
          %v1146 = vlaneseq
          %v1147 = vshrl.u32 %v1146, 7
          %v1148 = vsub.s32 0, %v1147
          %v1149 = vrot.slane %v1139, %v1148
          %v1150 = vlaneseq
          %v1151 = vshrl.u32 %v1150, 7
          %v1152 = vsub.s32 0, %v1151
          %v1153 = vrot.slane %v1143, %v1152
          %v1154 = vadd.f32 %v1129, %v1149
          %v1155 = vadd.f32 %v1130, %v1153
          %v1156 = vadd.f32 %v1131, %v1149
          %v1157 = vadd.f32 %v1132, %v1153
          %v1158 = vunpack.c.l.bf16 %v405
          %v1159 = vunpack.c.h.bf16 %v405
          %v1160 = vunpack.c.l.bf16 %v406
          %v1161 = vunpack.c.h.bf16 %v406
          %v1162 = vadd.f32 %v1158, %v1154
          %v1163 = vadd.f32 %v1159, %v1155
          %v1164 = vadd.f32 %v1160, %v1156
          %v1165 = vadd.f32 %v1161, %v1157
          %v1166 = vadd.f32 %v1162, %v1163
          %1167 = vadd.xlane.f32.xlu0 %v1166
          %v1168 = vpop.xlane.xlu0 %1167
          %v1169 = vadd.f32 %v1164, %v1165
          %1170 = vadd.xlane.f32.xlu0 %v1169
          %v1171 = vpop.xlane.xlu0 %1170
          %v1172 = vrcp.pop 256.0
          %v1173 = vmul.f32 %v1168, %v1172
          %v1174 = vmul.f32 %v1171, %v1172
          %v1175 = vsub.f32 %v1162, %v1173
          %v1176 = vsub.f32 %v1163, %v1173
          %v1177 = vsub.f32 %v1164, %v1174
          %v1178 = vsub.f32 %v1165, %v1174
          %v1179 = vmul.f32 %v1175, %v1175
          %v1180 = vmul.f32 %v1176, %v1176
          %v1181 = vmul.f32 %v1177, %v1177
          %v1182 = vmul.f32 %v1178, %v1178
          %v1183 = vadd.f32 %v1179, %v1180
          %1184 = vadd.xlane.f32.xlu0 %v1183
          %v1185 = vpop.xlane.xlu0 %1184
          %v1186 = vadd.f32 %v1181, %v1182
          %1187 = vadd.xlane.f32.xlu0 %v1186
          %v1188 = vpop.xlane.xlu0 %1187
          %v1189 = vmul.f32 %v1185, %v1172
          %v1190 = vmul.f32 %v1188, %v1172
          %v1191 = vadd.f32 %v1189, 1e-05
          %v1192 = vadd.f32 %v1190, 1e-05
          %v1193 = vrsqrt.pop %v1191
          %v1194 = vrsqrt.pop %v1192
          %v1195 = vmul.f32 %v1175, %v1193
          %v1196 = vmul.f32 %v1176, %v1193
          %v1197 = vmul.f32 %v1177, %v1194
          %v1198 = vmul.f32 %v1178, %v1194
          %v1199 = vld [vmem:[%s5] sm:$0x3]
          %v1200 = vunpack.c.l.bf16 %v1199
          %v1202 = vlaneseq
          %v1203 = vshrl.u32 %v1202, 7
          %v1204 = vsub.s32 0, %v1203
          %v1205 = vrot.slane %v1200, %v1204
          %v1206 = vlaneseq
          %v1207 = vshrl.u32 %v1206, 7
          %v1208 = vsub.s32 2, %v1207
          %v1209 = vrot.slane %v1200, %v1208
          %v1212 = vlaneseq
          %v1213 = vshrl.u32 %v1212, 7
          %v1214 = vsub.s32 0, %v1213
          %v1215 = vrot.slane %v1205, %v1214
          %v1216 = vlaneseq
          %v1217 = vshrl.u32 %v1216, 7
          %v1218 = vsub.s32 0, %v1217
          %v1219 = vrot.slane %v1209, %v1218
          %v1220 = vmul.f32 %v1195, %v1215
          %v1221 = vmul.f32 %v1196, %v1219
          %v1222 = vmul.f32 %v1197, %v1215
          %v1223 = vmul.f32 %v1198, %v1219
          %v1224 = vld [vmem:[%s6] sm:$0x3]
          %v1225 = vunpack.c.l.bf16 %v1224
          %v1227 = vlaneseq
          %v1228 = vshrl.u32 %v1227, 7
          %v1229 = vsub.s32 0, %v1228
          %v1230 = vrot.slane %v1225, %v1229
          %v1231 = vlaneseq
          %v1232 = vshrl.u32 %v1231, 7
          %v1233 = vsub.s32 2, %v1232
          %v1234 = vrot.slane %v1225, %v1233
          %v1237 = vlaneseq
          %v1238 = vshrl.u32 %v1237, 7
          %v1239 = vsub.s32 0, %v1238
          %v1240 = vrot.slane %v1230, %v1239
          %v1241 = vlaneseq
          %v1242 = vshrl.u32 %v1241, 7
          %v1243 = vsub.s32 0, %v1242
          %v1244 = vrot.slane %v1234, %v1243
          %v1245 = vadd.f32 %v1220, %v1240
          %v1246 = vadd.f32 %v1221, %v1244
          %v1247 = vadd.f32 %v1222, %v1240
          %v1248 = vadd.f32 %v1223, %v1244
          %v1249 = vpack.c.bf16 %v1247, %v1245
          %v1250 = vpack.c.bf16 %v1248, %v1246
          %v1253 = vunpack.c.l.b16 %v1249
          %v1254 = vunpack.c.l.b16 %v1250
          %v1255 = vunpack.c.h.b16 %v1249
          %v1256 = vunpack.c.h.b16 %v1250
          %v1257 = vpack.c.b16 %v1254, %v1253
          %v1258 = vpack.c.b16 %v1256, %v1255
          %1261 = vst [vmem:[%s398] sm:$0xff] %v1257
          %1262 = vst [vmem:[%s398 + $0x8] sm:$0xff] %v1258
        $region68: #{tpu_custom_call.1} parent=47 // pred_fallthru
          _
        %s1263 = sand.u32 %s214, 1
        %s1264 = scalar_lea.sflag [#allocation5], %s1263
        %s1265 = sand.u32 %s214, 1
        %s1266 = smul.addr %s1265, 16
        %s1267 = scalar_lea.vmem [#allocation9], %s1266
        // Predicated region
        $region69: #{tpu_custom_call.1} parent=47 // pred_check
          %p1268 = pneg %p224
        $region70: #{tpu_custom_call.1} parent=47 // pred_check_branch
          %1270 = sbr.rel (%p1268) target = $region72
        $region71: #{tpu_custom_call.1} parent=47 // pred_region
          %s1272 = ssub.s32 256, 256
          %1273 = vsyncadd %s1264, %s1272
          %s1274 = smul.addr %s31, 4
          %s1275 = smul.addr %s1274, 64
          %s1276 = scalar_lea.hbm %s7, %s1275
          %s1277 = sshll.u32 %s1267, 4
          %s1278 = int_to_ptr.vmem [resolvable:$true] %s1277
          %1283 = dma.vmem_to_hbm [thread:$0]  %s1278, 256, %s1276, %s1264, 128, 128, 8
        $region72: #{tpu_custom_call.1} parent=47 // pred_fallthru
          _
      $region48: #{tpu_custom_call.1} parent=5 // pred_fallthru
        _
      %p1284 = scmp.le.s32.totalorder 2, %s22
      // Predicated region
      $region73: #{tpu_custom_call.1} parent=5 // pred_check
        %p1285 = pneg %p1284
      $region74: #{tpu_custom_call.1} parent=5 // pred_check_branch
        %1287 = sbr.rel (%p1285) target = $region76
      $region75: #{tpu_custom_call.1} parent=5 // pred_region
        %s1288 = ssub.s32 %s22, 2
        // Predicated region
        $region77: #{tpu_custom_call.1} parent=75 // pred_check
          %p1289 = pneg %p230
        $region78: #{tpu_custom_call.1} parent=75 // pred_check_branch
          %1291 = sbr.rel (%p1289) target = $region80
        $region79: #{tpu_custom_call.1} parent=75 // pred_region
          %s1292 = sand.u32 %s215, 1
          %s1293 = scalar_lea.sflag [#allocation5], %s1292
          %s1294 = sand.u32 %s215, 1
          %s1295 = smul.addr %s1294, 16
          %s1296 = scalar_lea.vmem [#allocation9], %s1295
          %1297 = dma.done %s1293, 256
        $region80: #{tpu_custom_call.1} parent=75 // pred_fallthru
          _
      $region76: #{tpu_custom_call.1} parent=5 // pred_fallthru
        _
    $region6: #{tpu_custom_call.1} parent=1 // loop_footer
      %s26 = sadd.s32 1, %s22
    $region7: #{tpu_custom_call.1} parent=1 // loop_footer_branch
      %21 = sbr.rel target = $region3
    $region8: #{tpu_custom_call.1} parent=1 // loop_exit
      _
    %1298 = vsyncpa [#allocation4], 1
    %s1299 = scalar_lea.sflag [#allocation4], 1
    %1300 = vsyncpa %s1299, 1
    %1301 = vsyncpa [#allocation7], 1
    %s1302 = scalar_lea.sflag [#allocation7], 1
    %1303 = vsyncpa %s1302, 1
    %1304 = vsyncpa [#allocation5], 1
    %s1305 = scalar_lea.sflag [#allocation5], 1
    %1306 = vsyncpa %s1305, 1

</llo_original>
